<compile_context>
chip_gen: v6e
topology: v6e:2x2x1
jax: 0.10.0
libtpu: 0.0.40
codegen_flags: <defaults>
</compile_context>

<pallas_src>
import functools

import jax
import jax.numpy as jnp
from jax.experimental import pallas as pl
from jax.experimental.pallas import tpu as pltpu


def _round_up(x, m):
    return ((x + m - 1) // m) * m


# ----------------------------------------------------------------------------
# Fused kernel over grid (layer l, destination-row tile t)
# ----------------------------------------------------------------------------
def _make_gat_kernel(num_convs, tm, hidden, h_pad, in_pad, negative_slope=0.2):
    def kernel(x_ref, adj_ref, pool_ref, w_ref, b_ref, out_ref,
               h_cur, h_aug, a_src_row, a_dst_col):
        l = pl.program_id(0)
        t = pl.program_id(1)
        last_layer = num_convs - 1

        # ---- one-time init: stage the stacked node features into VMEM scratch.
        @pl.when(jnp.logical_and(l == 0, t == 0))
        def _init():
            h_cur[...] = x_ref[...]

        # ---- once per layer (first tile): projection matmul (bf16 MXU) that
        #      also yields both attention projections via two folded columns:
        #        col `hidden`   = W @ att_src^T,  col `hidden+1` = W @ att_dst^T
        @pl.when(t == 0)
        def _project():
            h_bf = h_cur[...].astype(jnp.bfloat16)
            h_aug_f32 = jnp.dot(h_bf, w_ref[0],
                                preferred_element_type=jnp.float32)
            h_aug[...] = h_aug_f32.astype(jnp.bfloat16)
            a_dst_col[...] = h_aug_f32[:, hidden + 1:hidden + 2]
            # Lane-dense source logits, built once per layer: fully aligned
            # (Np, Hp) -> (Hp, Np) transpose, then a single sublane row.
            a_src_row[...] = h_aug_f32.T[hidden:hidden + 1, :]

        # ---- per destination-row tile: masked softmax + aggregation + ELU.
        row0 = pl.multiple_of(t * tm, tm)
        adj_f = adj_ref[...].astype(jnp.float32)               # (tm, Np), 0/1
        a_dst = a_dst_col[pl.ds(row0, tm), :]                  # (tm, 1)
        e = a_dst + a_src_row[...]                             # (tm, Np)
        e = jnp.maximum(e, negative_slope * e)                 # LeakyReLU
        e = jnp.where(adj_f > 0.0, e, -1e30)                   # mask non-edges
        e_max = jnp.max(e, axis=-1, keepdims=True)
        p = jnp.exp(e - e_max)                                 # masked -> exact 0
        denom = jnp.sum(p, axis=-1, keepdims=True)             # >=1 (self loops)
        alpha = p * pl.reciprocal(denom, approx=True)          # EUP reciprocal

        h_new = jnp.dot(alpha.astype(jnp.bfloat16), h_aug[...],
                        preferred_element_type=jnp.float32) + b_ref[0]
        h_new = jnp.where(h_new > 0.0, h_new, jnp.exp(h_new) - 1.0)   # ELU
        # TODO(synk): inter-layer dropout is an eval-mode identity here.

        if in_pad > h_pad:  # static: keep h_cur writes full-width / lane-dense
            pad = jnp.zeros((tm, in_pad - h_pad), jnp.float32)
            h_store = jnp.concatenate([h_new, pad], axis=-1)
        else:
            h_store = h_new
        h_cur[pl.ds(row0, tm), :] = h_store

        # ---- last layer: fused global_add_pool for BOTH graphs, accumulated
        #      straight into the output block (one small MXU matmul per tile).
        @pl.when(jnp.logical_and(l == last_layer, t == 0))
        def _zero_out():
            out_ref[...] = jnp.zeros_like(out_ref)

        @pl.when(l == last_layer)
        def _pool():
            out_ref[...] += jnp.dot(pool_ref[...], h_new.astype(jnp.bfloat16),
                                    preferred_element_type=jnp.float32)

    return kernel


# ----------------------------------------------------------------------------
# Host-side wrapper: padding, int8 adjacency, stacked params, pallas_call
# ----------------------------------------------------------------------------
@functools.partial(jax.jit, static_argnames=("num_graphs", "tile_rows"))
def gat_forward(params, x1, edge_index1, batch1, x2, edge_index2, batch2,
                num_graphs, tile_rows=256):
    n1, f_in = x1.shape
    n2 = x2.shape[0]
    hidden = params[0][0].shape[1]
    num_convs = len(params)

    # Lane-dense padding (last dims multiples of 128).
    n_pad = _round_up(n1 + n2, 128)
    h_pad = _round_up(hidden + 2, 128)        # +2 folded attention columns
    in_pad = max(_round_up(f_in, 128), h_pad)
    g_pad = _round_up(num_graphs, 8)

    # Destination-row tile: 256 default (v7x's 64 MiB VMEM); 512 works on
    # v5e/v6e. Always falls back to 128 so it divides n_pad.
    tm = min(tile_rows, n_pad)
    while tm > 128 and n_pad % tm:
        tm //= 2
    if n_pad % tm:
        tm = 128
    num_tiles = n_pad // tm

    # Stacked, zero-padded node features (both graphs in one slab).
    x = jnp.zeros((n_pad, in_pad), jnp.float32)
    x = x.at[:n1, :f_in].set(x1)
    x = x.at[n1:n1 + n2, :f_in].set(x2)

    # Block-diagonal int8 adjacency (row = dst, col = src) + self loops on every
    # row (incl. padding) so no softmax row has empty support.
    adj = jnp.zeros((n_pad, n_pad), jnp.int8)
    adj = adj.at[edge_index1[1], edge_index1[0]].set(1)
    adj = adj.at[edge_index2[1] + n1, edge_index2[0] + n1].set(1)
    diag = jnp.arange(n_pad)
    adj = adj.at[diag, diag].set(1)

    # Fused global_add_pool selector: rows [0, G) pool graph-1 nodes, rows
    # [g_pad, g_pad + G) pool graph-2 nodes. bf16 is exact for 0/1.
    oh1 = jax.nn.one_hot(batch1, num_graphs, dtype=jnp.float32).T     # (G, n1)
    oh2 = jax.nn.one_hot(batch2, num_graphs, dtype=jnp.float32).T     # (G, n2)
    pool = jnp.zeros((2 * g_pad, n_pad), jnp.float32)
    pool = pool.at[:num_graphs, :n1].set(oh1)
    pool = pool.at[g_pad:g_pad + num_graphs, n1:n1 + n2].set(oh2)
    pool = pool.astype(jnp.bfloat16)

    # Stacked per-layer weights (bf16, attention vectors folded into two extra
    # columns) and biases (f32).
    w_list, b_list = [], []
    for (w, att_src, att_dst, bias) in params:
        f_l = w.shape[0]
        w_aug = jnp.zeros((in_pad, h_pad), jnp.float32)
        w_aug = w_aug.at[:f_l, :hidden].set(w)
        w_aug = w_aug.at[:f_l, hidden].set((w @ att_src.T)[:, 0])
        w_aug = w_aug.at[:f_l, hidden + 1].set((w @ att_dst.T)[:, 0])
        w_list.append(w_aug)
        b_list.append(jnp.zeros((1, h_pad), jnp.float32).at[:, :hidden].set(bias))
    w_stack = jnp.stack(w_list).astype(jnp.bfloat16)      # (L, in_pad, h_pad)
    b_stack = jnp.stack(b_list)                           # (L, 1, h_pad) f32

    # Scoped-VMEM budget from the actually-resident buffers (+ margin).
    est = (
        n_pad * in_pad * 4          # x (resident, constant block index)
        + n_pad * in_pad * 4        # h_cur scratch (f32)
        + n_pad * h_pad * 2         # h_aug scratch (bf16)
        + n_pad * 128 * 4           # a_dst_col (lane-padded)
        + 8 * n_pad * 4             # a_src_row (sublane-padded)
        + 2 * tm * n_pad            # adj row-block, double-buffered int8
        + 2 * 2 * g_pad * tm * 2    # pool block, double-buffered bf16
        + 2 * in_pad * h_pad * 2    # weight block, double-buffered bf16
        + 2 * 8 * h_pad * 4         # bias block, double-buffered
        + 2 * g_pad * h_pad * 4     # output block
    )
    vmem_limit = int(min(2 * est + (8 << 20), 96 * 1024 * 1024))

    kernel = _make_gat_kernel(num_convs, tm, hidden, h_pad, in_pad)
    pooled = pl.pallas_call(
        kernel,
        out_shape=jax.ShapeDtypeStruct((2 * g_pad, h_pad), jnp.float32),
        grid=(num_convs, num_tiles),
        in_specs=[
            pl.BlockSpec((n_pad, in_pad), lambda l, t: (0, 0)),        # x
            pl.BlockSpec((tm, n_pad), lambda l, t: (t, 0)),            # adj int8
            pl.BlockSpec((2 * g_pad, tm), lambda l, t: (0, t)),        # pool
            pl.BlockSpec((1, in_pad, h_pad), lambda l, t: (l, 0, 0)),  # weights
            pl.BlockSpec((1, 1, h_pad), lambda l, t: (l, 0, 0)),       # biases
        ],
        out_specs=pl.BlockSpec((2 * g_pad, h_pad), lambda l, t: (0, 0)),
        scratch_shapes=[
            pltpu.VMEM((n_pad, in_pad), jnp.float32),   # h_cur (layer input)
            pltpu.VMEM((n_pad, h_pad), jnp.bfloat16),   # h_aug (projected)
            pltpu.VMEM((1, n_pad), jnp.float32),        # a_src (lane row)
            pltpu.VMEM((n_pad, 1), jnp.float32),        # a_dst (column)
        ],
        compiler_params=pltpu.CompilerParams(
            # Row tiles of layer l depend on the full layer l-1 output kept in
            # scratch -> neither grid axis may be megacore-sharded.
            dimension_semantics=("arbitrary", "arbitrary"),
            vmem_limit_bytes=vmem_limit,
        ),
    )(x, adj, pool, w_stack, b_stack)

    # Tiny epilogue: strip padded lanes / graph rows and take the flattened dot.
    p1 = pooled[:num_graphs, :hidden]
    p2 = pooled[g_pad:g_pad + num_graphs, :hidden]
    return jnp.sum(p1 * p2)


# ----------------------------------------------------------------------------
# Parameter init (glorot-style, shapes follow GAT.__init__) + pure-JAX reference
# ----------------------------------------------------------------------------
def init_params(key, num_features, hidden_channels, num_layers):
    params = []
    dims = [(num_features, hidden_channels)]
    dims += [(hidden_channels, hidden_channels)] * (num_layers - 2)
    for (f_in, f_out) in dims:
        key, k1, k2, k3 = jax.random.split(key, 4)
        scale_w = jnp.sqrt(6.0 / (f_in + f_out))
        w = jax.random.uniform(k1, (f_in, f_out), jnp.float32, -scale_w, scale_w)
        scale_a = jnp.sqrt(6.0 / (1 + f_out))
        att_src = jax.random.uniform(k2, (1, f_out), jnp.float32, -scale_a, scale_a)
        att_dst = jax.random.uniform(k3, (1, f_out), jnp.float32, -scale_a, scale_a)
        bias = jnp.zeros((1, f_out), jnp.float32)
        params.append((w, att_src, att_dst, bias))
    return params


def _reference_forward(params, x1, ei1, b1, x2, ei2, b2, num_graphs):
    """Plain-JAX f32 reference mirroring the PyTorch module (eval mode)."""
    def dense_adj(ei, n):
        a = jnp.zeros((n, n), jnp.float32).at[ei[1], ei[0]].set(1.0)
        d = jnp.arange(n)
        return a.at[d, d].set(1.0)

    def conv(x, adj, w, asrc, adst, bias):
        h = x @ w
        a_s = jnp.sum(h * asrc, axis=-1, keepdims=True)
        a_d = jnp.sum(h * adst, axis=-1, keepdims=True)
        e = a_d + a_s.T
        e = jnp.where(e > 0, e, 0.2 * e)
        e = jnp.where(adj > 0, e, -1e30)
        p = jnp.where(adj > 0, jnp.exp(e - e.max(-1, keepdims=True)), 0.0)
        alpha = p / p.sum(-1, keepdims=True)
        out = alpha @ h + bias
        return jnp.where(out > 0, out, jnp.exp(out) - 1.0)    # ELU after every conv

    h1, adj1 = x1, dense_adj(ei1, x1.shape[0])
    h2, adj2 = x2, dense_adj(ei2, x2.shape[0])
    for (w, a_s, a_d, b) in params:
        h1 = conv(h1, adj1, w, a_s, a_d, b)
    for (w, a_s, a_d, b) in params:
        h2 = conv(h2, adj2, w, a_s, a_d, b)
    p1 = jax.nn.one_hot(b1, num_graphs, dtype=jnp.float32).T @ h1
    p2 = jax.nn.one_hot(b2, num_graphs, dtype=jnp.float32).T @ h2
    return jnp.sum(p1 * p2)


# ----------------------------------------------------------------------------
# Demo
# ----------------------------------------------------------------------------
if __name__ == "__main__":
    key = jax.random.PRNGKey(0)

    num_features = 8
    hidden_channels = 32
    num_layers = 3          # -> 2 GATConv layers, as in the PyTorch module
    num_nodes = 16
    num_graphs = 2

    k_x1, k_x2, k_p = jax.random.split(key, 3)
    x1 = jax.random.normal(k_x1, (num_nodes, num_features), jnp.float32)
    x2 = jax.random.normal(k_x2, (num_nodes, num_features), jnp.float32)

    # Two graphs of 8 nodes each; edges = directed ring inside each graph.
    def ring_edges(offset, n):
        src = jnp.arange(n) + offset
        dst = (jnp.arange(n) + 1) % n + offset
        return src, dst

    s1a, d1a = ring_edges(0, 8)
    s1b, d1b = ring_edges(8, 8)
    edge_index1 = jnp.stack([jnp.concatenate([s1a, s1b]),
                             jnp.concatenate([d1a, d1b])]).astype(jnp.int32)
    edge_index2 = jnp.stack([edge_index1[1], edge_index1[0]])   # reversed rings

    batch1 = jnp.concatenate([jnp.zeros(8, jnp.int32), jnp.ones(8, jnp.int32)])
    batch2 = batch1

    params = init_params(k_p, num_features, hidden_channels, num_layers)

    out = gat_forward(params, x1, edge_index1, batch1,
                      x2, edge_index2, batch2, num_graphs=num_graphs)
    out = jax.block_until_ready(out)

    ref = _reference_forward(params, x1, edge_index1, batch1,
                             x2, edge_index2, batch2, num_graphs)

    assert out.shape == () and out.dtype == jnp.float32
    assert bool(jnp.isfinite(out))
    # Tolerance covers bf16 MXU operands + approximate softmax reciprocal.
    assert bool(jnp.allclose(out, ref, rtol=5e-2, atol=5e-2)), (out, ref)
    print("KERNEL_OK")
</pallas_src>

<mosaic_0001>
module attributes {stable_mosaic.version = 11 : i64} {
  func.func @kernel(%arg0: i32, %arg1: i32, %arg2: memref<128x128xf32, #tpu.memory_space<vmem>>, %arg3: memref<128x128xi8, #tpu.memory_space<vmem>>, %arg4: memref<16x128xbf16, #tpu.memory_space<vmem>>, %arg5: memref<1x128x128xbf16, #tpu.memory_space<vmem>>, %arg6: memref<1x1x128xf32, #tpu.memory_space<vmem>>, %arg7: memref<16x128xf32, #tpu.memory_space<vmem>>, %arg8: memref<128x128xf32, #tpu.memory_space<vmem>>, %arg9: memref<128x128xbf16, #tpu.memory_space<vmem>>, %arg10: memref<1x128xf32, #tpu.memory_space<vmem>>, %arg11: memref<128x1xf32, #tpu.memory_space<vmem>>) attributes {dimension_semantics = [#tpu.dimension_semantics<arbitrary>, #tpu.dimension_semantics<arbitrary>], iteration_bounds = array<i64: 2, 1>, scalar_prefetch = 0 : i64, scratch_operands = 4 : i64, tpu.core_type = #tpu.core_type<tc>, window_params = [{pipeline_mode = #tpu.pipeline_mode<synchronous>, transform_indices = @transform_0, window_bounds = array<i64: 128, 128>}, {transform_indices = @transform_1, window_bounds = array<i64: 128, 128>}, {transform_indices = @transform_2, window_bounds = array<i64: 16, 128>}, {transform_indices = @transform_3, window_bounds = array<i64: 1, 128, 128>}, {transform_indices = @transform_4, window_bounds = array<i64: 1, 1, 128>}, {pipeline_mode = #tpu.pipeline_mode<synchronous>, transform_indices = @transform_5, window_bounds = array<i64: 16, 128>}]} {
    %c0_i32 = arith.constant 0 : i32
    %0 = arith.cmpi eq, %arg0, %c0_i32 : i32
    %c0_i32_0 = arith.constant 0 : i32
    %1 = arith.cmpi eq, %arg1, %c0_i32_0 : i32
    %2 = arith.andi %0, %1 : i1
    %3 = arith.extui %2 : i1 to i32
    %c0_i32_1 = arith.constant 0 : i32
    %4 = arith.cmpi ne, %3, %c0_i32_1 : i32
    scf.if %4 {
      %c0_25 = arith.constant 0 : index
      %c0_26 = arith.constant 0 : index
      %58 = vector.load %arg2[%c0_25, %c0_26] : memref<128x128xf32, #tpu.memory_space<vmem>>, vector<128x128xf32>
      %c0_27 = arith.constant 0 : index
      %c0_28 = arith.constant 0 : index
      %59 = vector.load %arg8[%c0_27, %c0_28] : memref<128x128xf32, #tpu.memory_space<vmem>>, vector<128x128xf32>
      tpu.vector_store %arg8[%c0_27, %c0_28], %58 {strides = array<i32>} : memref<128x128xf32, #tpu.memory_space<vmem>>, vector<128x128xf32>,
    } else {
    }
    %c0_i32_2 = arith.constant 0 : i32
    %5 = arith.cmpi eq, %arg1, %c0_i32_2 : i32
    %6 = arith.extui %5 : i1 to i32
    %c0_i32_3 = arith.constant 0 : i32
    %7 = arith.cmpi ne, %6, %c0_i32_3 : i32
    scf.if %7 {
      %c0_25 = arith.constant 0 : index
      %c0_26 = arith.constant 0 : index
      %58 = vector.load %arg8[%c0_25, %c0_26] : memref<128x128xf32, #tpu.memory_space<vmem>>, vector<128x128xf32>
      %59 = arith.truncf %58 : vector<128x128xf32> to vector<128x128xbf16>
      %c0_27 = arith.constant 0 : index
      %c0_28 = arith.constant 0 : index
      %c0_29 = arith.constant 0 : index
      %60 = vector.load %arg5[%c0_27, %c0_28, %c0_29] : memref<1x128x128xbf16, #tpu.memory_space<vmem>>, vector<1x128x128xbf16>
      %61 = vector.shape_cast %60 : vector<1x128x128xbf16> to vector<128x128xbf16>
      %cst_30 = arith.constant dense<0.000000e+00> : vector<128x128xf32>
      %62 = tpu.matmul %59, %61, %cst_30 {dimension_numbers = #tpu.dot_dimension_numbers<[1], [0], [0], [1], [0, 0, 1, 1], [], []>} : vector<128x128xbf16>, vector<128x128xbf16>, vector<128x128xf32> -> vector<128x128xf32>
      %63 = arith.truncf %62 : vector<128x128xf32> to vector<128x128xbf16>
      %c0_31 = arith.constant 0 : index
      %c0_32 = arith.constant 0 : index
      %64 = vector.load %arg9[%c0_31, %c0_32] : memref<128x128xbf16, #tpu.memory_space<vmem>>, vector<128x128xbf16>
      tpu.vector_store %arg9[%c0_31, %c0_32], %63 {strides = array<i32>} : memref<128x128xbf16, #tpu.memory_space<vmem>>, vector<128x128xbf16>,
      %65 = vector.extract_strided_slice %62 {offsets = [0, 33], sizes = [128, 1], strides = [1, 1]} : vector<128x128xf32> to vector<128x1xf32>
      %c0_33 = arith.constant 0 : index
      %c0_34 = arith.constant 0 : index
      %66 = vector.load %arg11[%c0_33, %c0_34] : memref<128x1xf32, #tpu.memory_space<vmem>>, vector<128x1xf32>
      tpu.vector_store %arg11[%c0_33, %c0_34], %65 {strides = array<i32>} : memref<128x1xf32, #tpu.memory_space<vmem>>, vector<128x1xf32>,
      %67 = tpu.transpose %62, [1, 0] : vector<128x128xf32> -> vector<128x128xf32>
      %68 = vector.extract_strided_slice %67 {offsets = [32, 0], sizes = [1, 128], strides = [1, 1]} : vector<128x128xf32> to vector<1x128xf32>
      %c0_35 = arith.constant 0 : index
      %c0_36 = arith.constant 0 : index
      %69 = vector.load %arg10[%c0_35, %c0_36] : memref<1x128xf32, #tpu.memory_space<vmem>>, vector<1x128xf32>
      tpu.vector_store %arg10[%c0_35, %c0_36], %68 {strides = array<i32>} : memref<1x128xf32, #tpu.memory_space<vmem>>, vector<1x128xf32>,
    } else {
    }
    %c128_i32 = arith.constant 128 : i32
    %8 = arith.muli %arg1, %c128_i32 : i32
    %9 = tpu.assume_multiple %8, 128 : i32
    %c0 = arith.constant 0 : index
    %c0_4 = arith.constant 0 : index
    %10 = vector.load %arg3[%c0, %c0_4] : memref<128x128xi8, #tpu.memory_space<vmem>>, vector<128x128xi8>
    %11 = arith.sitofp %10 : vector<128x128xi8> to vector<128x128xf32>
    %12 = arith.index_cast %9 : i32 to index
    %c0_5 = arith.constant 0 : index
    %13 = vector.load %arg11[%12, %c0_5] : memref<128x1xf32, #tpu.memory_space<vmem>>, vector<128x1xf32>
    %c0_6 = arith.constant 0 : index
    %c0_7 = arith.constant 0 : index
    %14 = vector.load %arg10[%c0_6, %c0_7] : memref<1x128xf32, #tpu.memory_space<vmem>>, vector<1x128xf32>
    %15 = vector.broadcast %13 : vector<128x1xf32> to vector<128x128xf32>
    %16 = vector.broadcast %14 : vector<1x128xf32> to vector<128x128xf32>
    %17 = arith.addf %15, %16 : vector<128x128xf32>
    %cst = arith.constant 2.000000e-01 : f32
    %18 = vector.broadcast %cst : f32 to vector<128x128xf32>
    %19 = arith.mulf %18, %17 : vector<128x128xf32>
    %20 = arith.maximumf %17, %19 : vector<128x128xf32>
    %cst_8 = arith.constant 0.000000e+00 : f32
    %21 = vector.broadcast %cst_8 : f32 to vector<128x128xf32>
    %22 = arith.cmpf ogt, %11, %21 : vector<128x128xf32>
    %cst_9 = arith.constant -1.000000e+30 : f32
    %23 = vector.broadcast %cst_9 : f32 to vector<128x128xf32>
    %24 = arith.select %22, %20, %23 : vector<128x128xi1>, vector<128x128xf32>
    %cst_10 = arith.constant dense<0xFF800000> : vector<128xf32>
    %25 = vector.multi_reduction <maximumf>, %24, %cst_10 [1] : vector<128x128xf32> to vector<128xf32>
    %26 = vector.shape_cast %25 : vector<128xf32> to vector<128x1xf32>
    %27 = vector.broadcast %26 : vector<128x1xf32> to vector<128x128xf32>
    %28 = arith.subf %24, %27 : vector<128x128xf32>
    %29 = math.exp %28 : vector<128x128xf32>
    %cst_11 = arith.constant dense<0.000000e+00> : vector<128xf32>
    %30 = vector.multi_reduction <add>, %29, %cst_11 [1] : vector<128x128xf32> to vector<128xf32>
    %31 = vector.shape_cast %30 : vector<128xf32> to vector<128x1xf32>
    %32 = tpu.reciprocal %31 {approx = true} : vector<128x1xf32> -> vector<128x1xf32>
    %33 = vector.broadcast %32 : vector<128x1xf32> to vector<128x128xf32>
    %34 = arith.mulf %29, %33 : vector<128x128xf32>
    %35 = arith.truncf %34 : vector<128x128xf32> to vector<128x128xbf16>
    %c0_12 = arith.constant 0 : index
    %c0_13 = arith.constant 0 : index
    %36 = vector.load %arg9[%c0_12, %c0_13] : memref<128x128xbf16, #tpu.memory_space<vmem>>, vector<128x128xbf16>
    %cst_14 = arith.constant dense<0.000000e+00> : vector<128x128xf32>
    %37 = tpu.matmul %35, %36, %cst_14 {dimension_numbers = #tpu.dot_dimension_numbers<[1], [0], [0], [1], [0, 0, 1, 1], [], []>} : vector<128x128xbf16>, vector<128x128xbf16>, vector<128x128xf32> -> vector<128x128xf32>
    %c0_15 = arith.constant 0 : index
    %c0_16 = arith.constant 0 : index
    %c0_17 = arith.constant 0 : index
    %38 = vector.load %arg6[%c0_15, %c0_16, %c0_17] : memref<1x1x128xf32, #tpu.memory_space<vmem>>, vector<1x1x128xf32>
    %39 = vector.shape_cast %38 : vector<1x1x128xf32> to vector<1x128xf32>
    %40 = vector.broadcast %39 : vector<1x128xf32> to vector<128x128xf32>
    %41 = arith.addf %37, %40 : vector<128x128xf32>
    %cst_18 = arith.constant 0.000000e+00 : f32
    %42 = vector.broadcast %cst_18 : f32 to vector<128x128xf32>
    %43 = arith.cmpf ogt, %41, %42 : vector<128x128xf32>
    %44 = math.exp %41 : vector<128x128xf32>
    %cst_19 = arith.constant 1.000000e+00 : f32
    %45 = vector.broadcast %cst_19 : f32 to vector<128x128xf32>
    %46 = arith.subf %44, %45 : vector<128x128xf32>
    %47 = arith.select %43, %41, %46 : vector<128x128xi1>, vector<128x128xf32>
    %48 = arith.index_cast %9 : i32 to index
    %c0_20 = arith.constant 0 : index
    %49 = vector.load %arg8[%48, %c0_20] : memref<128x128xf32, #tpu.memory_space<vmem>>, vector<128x128xf32>
    tpu.vector_store %arg8[%48, %c0_20], %47 {strides = array<i32>} : memref<128x128xf32, #tpu.memory_space<vmem>>, vector<128x128xf32>,
    %c1_i32 = arith.constant 1 : i32
    %50 = arith.cmpi eq, %arg0, %c1_i32 : i32
    %c0_i32_21 = arith.constant 0 : i32
    %51 = arith.cmpi eq, %arg1, %c0_i32_21 : i32
    %52 = arith.andi %50, %51 : i1
    %53 = arith.extui %52 : i1 to i32
    %c0_i32_22 = arith.constant 0 : i32
    %54 = arith.cmpi ne, %53, %c0_i32_22 : i32
    scf.if %54 {
      %cst_25 = arith.constant 0.000000e+00 : f32
      %58 = vector.broadcast %cst_25 : f32 to vector<16x128xf32>
      %c0_26 = arith.constant 0 : index
      %c0_27 = arith.constant 0 : index
      %59 = vector.load %arg7[%c0_26, %c0_27] : memref<16x128xf32, #tpu.memory_space<vmem>>, vector<16x128xf32>
      tpu.vector_store %arg7[%c0_26, %c0_27], %58 {strides = array<i32>} : memref<16x128xf32, #tpu.memory_space<vmem>>, vector<16x128xf32>,
    } else {
    }
    %c1_i32_23 = arith.constant 1 : i32
    %55 = arith.cmpi eq, %arg0, %c1_i32_23 : i32
    %56 = arith.extui %55 : i1 to i32
    %c0_i32_24 = arith.constant 0 : i32
    %57 = arith.cmpi ne, %56, %c0_i32_24 : i32
    scf.if %57 {
      %c0_25 = arith.constant 0 : index
      %c0_26 = arith.constant 0 : index
      %58 = vector.load %arg7[%c0_25, %c0_26] : memref<16x128xf32, #tpu.memory_space<vmem>>, vector<16x128xf32>
      %c0_27 = arith.constant 0 : index
      %c0_28 = arith.constant 0 : index
      %59 = vector.load %arg4[%c0_27, %c0_28] : memref<16x128xbf16, #tpu.memory_space<vmem>>, vector<16x128xbf16>
      %60 = arith.truncf %47 : vector<128x128xf32> to vector<128x128xbf16>
      %cst_29 = arith.constant dense<0.000000e+00> : vector<16x128xf32>
      %61 = tpu.matmul %59, %60, %cst_29 {dimension_numbers = #tpu.dot_dimension_numbers<[1], [0], [0], [1], [0, 0, 1, 1], [], []>} : vector<16x128xbf16>, vector<128x128xbf16>, vector<16x128xf32> -> vector<16x128xf32>
      %62 = arith.addf %58, %61 : vector<16x128xf32>
      %c0_30 = arith.constant 0 : index
      %c0_31 = arith.constant 0 : index
      %63 = vector.load %arg7[%c0_30, %c0_31] : memref<16x128xf32, #tpu.memory_space<vmem>>, vector<16x128xf32>
      tpu.vector_store %arg7[%c0_30, %c0_31], %62 {strides = array<i32>} : memref<16x128xf32, #tpu.memory_space<vmem>>, vector<16x128xf32>,
    } else {
    }
    return
  }
  func.func @transform_0(%arg0: i32, %arg1: i32) -> (i32, i32) {
    %c0_i32 = arith.constant 0 : i32
    %c0_i32_0 = arith.constant 0 : i32
    %c0_i32_1 = arith.constant 0 : i32
    return %c0_i32, %c0_i32_0 : i32, i32
  }
  func.func @transform_1(%arg0: i32, %arg1: i32) -> (i32, i32) {
    %c0_i32 = arith.constant 0 : i32
    %c0_i32_0 = arith.constant 0 : i32
    return %arg1, %c0_i32 : i32, i32
  }
  func.func @transform_2(%arg0: i32, %arg1: i32) -> (i32, i32) {
    %c0_i32 = arith.constant 0 : i32
    %c0_i32_0 = arith.constant 0 : i32
    return %c0_i32, %arg1 : i32, i32
  }
  func.func @transform_3(%arg0: i32, %arg1: i32) -> (i32, i32, i32) {
    %c0_i32 = arith.constant 0 : i32
    %c0_i32_0 = arith.constant 0 : i32
    %c0_i32_1 = arith.constant 0 : i32
    return %arg0, %c0_i32, %c0_i32_0 : i32, i32, i32
  }
  func.func @transform_4(%arg0: i32, %arg1: i32) -> (i32, i32, i32) {
    %c0_i32 = arith.constant 0 : i32
    %c0_i32_0 = arith.constant 0 : i32
    %c0_i32_1 = arith.constant 0 : i32
    return %arg0, %c0_i32, %c0_i32_0 : i32, i32, i32
  }
  func.func @transform_5(%arg0: i32, %arg1: i32) -> (i32, i32) {
    %c0_i32 = arith.constant 0 : i32
    %c0_i32_0 = arith.constant 0 : i32
    %c0_i32_1 = arith.constant 0 : i32
    return %c0_i32, %c0_i32_0 : i32, i32
  }
}

</mosaic_0001>

<llo_original>
// kernel: gat_forward.1
$region0: #{gat_forward.1}
  #allocation0 [shape = 'u32[]', space=smem, size = 0x4, offset = 0x4, fixed_abs, tag = 'smem constant byte address 0x4 - core index']
  #allocation1 [shape = 'u32[144,128]{1,0:T(1,128)}', space=vmem, size = 0x12000, scoped, tag = 'internal scratch']
  #allocation2 [shape = 'f32[128,128]{1,0:T(8,128)}', space=vmem, size = 0x10000, scoped, tag = 'scratch operand']
  #allocation3 [shape = 'bf16[128,128]{1,0:T(8,128)(2,1)}', space=vmem, size = 0x8000, scoped, tag = 'scratch operand']
  #allocation4 [shape = 'f32[1,128]{1,0:T(1,128)}', space=vmem, size = 0x200, scoped, tag = 'scratch operand']
  #allocation5 [shape = 'f32[128,1]{1,0:T(8,128)}', space=vmem, size = 0x10000, scoped, tag = 'scratch operand']
  %s0 = inlined_call_operand.vmem [shape: f32[128,128], index: 0, kind: input, shape index: {}]
  %s1 = inlined_call_operand.vmem [shape: s8[128,128], index: 1, kind: input, shape index: {}]
  %s2 = inlined_call_operand.vmem [shape: bf16[16,128], index: 2, kind: input, shape index: {}]
  %s3 = inlined_call_operand.vmem [shape: bf16[2,128,128], index: 3, kind: input, shape index: {}]
  %s4 = inlined_call_operand.vmem [shape: f32[2,1,128], index: 4, kind: input, shape index: {}]
  %s5 = inlined_call_operand.vmem [shape: f32[16,128], index: 5, kind: output, shape index: {}]
  %s6 = sld [smem:[#allocation0]]
  $region69: #{gat_forward.1} parent=0
    _
  %s8 = ssub.s32 1, %s6
  %s9 = scalar_select 0, %s8, %s6
  loop: start=0, step=1, limit=4
  $region2: #{gat_forward.1} parent=0 // loop_pre_header
    _
  $region3: #{gat_forward.1} parent=0 // loop_header
    %s11 = sphi 0, %s15
    %p12 = scmp.ge.s32.totalorder %s11, 4
    %s18 = sphi 0, %s30
    %s19 = sphi 0, %s26
    %s20 = sphi 0, %s18
    %s21 = sphi 0, %s19
    %s22 = sphi 0, %s20
    %s23 = sphi 0, %s21
    %s31 = sphi 0, %s31
    %s33 = sphi 0, %s31
    %s34 = sphi 0, %s33
    %s48 = sphi 0, %s34
    %s54 = sphi 0, %s56
    %s57 = sphi 0, %s54
    %s58 = sphi 0, %s57
    %s74 = sphi 0, %s58
    %s80 = sphi 0, %s82
    %s83 = sphi 0, %s80
    %s84 = sphi 0, %s83
    %s100 = sphi 0, %s84
    %s106 = sphi 0, %s108
    %s109 = sphi 0, %s106
    %s110 = sphi 0, %s109
    %s126 = sphi 0, %s110
    %s132 = sphi 0, %s134
    %s135 = sphi 0, %s132
    %s136 = sphi 0, %s135
    %s152 = sphi 0, %s136
    %s156 = sphi 0, %s156
    %s158 = sphi 0, %s156
    %s159 = sphi 0, %s158
    %s173 = sphi 0, %s159
  $region4: #{gat_forward.1} parent=0 // loop_header_branch
    %14 = sbr.rel (%p12) target = $region8
  $region5: #{gat_forward.1} parent=0 // loop_body
    %s16 = ssub.s32 %s11, 1
    %s17 = ssub.s32 %s11, 2
    %s24 = sadd.s32 1, %s19
    %p25 = scmp.ge.s32.totalorder %s24, 1
    %s26 = scalar_select %p25, 0, %s24
    %s27 = sadd.s32 1, %s18
    %s28 = scalar_select %p25, %s27, %s18
    %p29 = scmp.ge.s32.totalorder %s28, 2
    %s30 = scalar_select %p29, 0, %s28
    %s32 = sadd.s32 %s31, 1
    %p35 = scmp.eq.s32.totalorder %s11, 1
    %p36 = scmp.ne.s32.totalorder %s31, %s33
    %p37 = scmp.eq.s32.totalorder %s11, 0
    %p38 = por %p36, %p37
    %p39 = scmp.ne.s32.totalorder %s31, %s33
    %p40 = scmp.eq.s32.totalorder %s16, 1
    %p41 = por %p39, %p40
    %p42 = scmp.ne.s32.totalorder %s33, %s34
    %p43 = scmp.eq.s32.totalorder %s16, 0
    %p44 = por %p42, %p43
    %p45 = scmp.ne.s32.totalorder %s33, %s34
    %p46 = scmp.eq.s32.totalorder %s17, 1
    %p47 = por %p45, %p46
    %p49 = scmp.ne.s32.totalorder %s34, %s48
    %p50 = scmp.eq.s32.totalorder %s17, 0
    %p51 = por %p49, %p50
    %s52 = ssub.s32 %s19, %s26
    %p53 = scmp.eq.s32.totalorder %s52, 0
    %s55 = sadd.s32 %s54, 1
    %s56 = scalar_select %p53, %s54, %s55
    %p59 = pneg %p53
    %p60 = scmp.eq.s32.totalorder %s11, 1
    %p61 = por %p59, %p60
    %p62 = scmp.ne.s32.totalorder %s54, %s57
    %p63 = scmp.eq.s32.totalorder %s11, 0
    %p64 = por %p62, %p63
    %p65 = scmp.ne.s32.totalorder %s54, %s57
    %p66 = scmp.eq.s32.totalorder %s16, 1
    %p67 = por %p65, %p66
    %p68 = scmp.ne.s32.totalorder %s57, %s58
    %p69 = scmp.eq.s32.totalorder %s16, 0
    %p70 = por %p68, %p69
    %p71 = scmp.ne.s32.totalorder %s57, %s58
    %p72 = scmp.eq.s32.totalorder %s17, 1
    %p73 = por %p71, %p72
    %p75 = scmp.ne.s32.totalorder %s58, %s74
    %p76 = scmp.eq.s32.totalorder %s17, 0
    %p77 = por %p75, %p76
    %s78 = ssub.s32 %s19, %s26
    %p79 = scmp.eq.s32.totalorder %s78, 0
    %s81 = sadd.s32 %s80, 1
    %s82 = scalar_select %p79, %s80, %s81
    %p85 = pneg %p79
    %p86 = scmp.eq.s32.totalorder %s11, 1
    %p87 = por %p85, %p86
    %p88 = scmp.ne.s32.totalorder %s80, %s83
    %p89 = scmp.eq.s32.totalorder %s11, 0
    %p90 = por %p88, %p89
    %p91 = scmp.ne.s32.totalorder %s80, %s83
    %p92 = scmp.eq.s32.totalorder %s16, 1
    %p93 = por %p91, %p92
    %p94 = scmp.ne.s32.totalorder %s83, %s84
    %p95 = scmp.eq.s32.totalorder %s16, 0
    %p96 = por %p94, %p95
    %p97 = scmp.ne.s32.totalorder %s83, %s84
    %p98 = scmp.eq.s32.totalorder %s17, 1
    %p99 = por %p97, %p98
    %p101 = scmp.ne.s32.totalorder %s84, %s100
    %p102 = scmp.eq.s32.totalorder %s17, 0
    %p103 = por %p101, %p102
    %s104 = ssub.s32 %s18, %s30
    %p105 = scmp.eq.s32.totalorder %s104, 0
    %s107 = sadd.s32 %s106, 1
    %s108 = scalar_select %p105, %s106, %s107
    %p111 = pneg %p105
    %p112 = scmp.eq.s32.totalorder %s11, 1
    %p113 = por %p111, %p112
    %p114 = scmp.ne.s32.totalorder %s106, %s109
    %p115 = scmp.eq.s32.totalorder %s11, 0
    %p116 = por %p114, %p115
    %p117 = scmp.ne.s32.totalorder %s106, %s109
    %p118 = scmp.eq.s32.totalorder %s16, 1
    %p119 = por %p117, %p118
    %p120 = scmp.ne.s32.totalorder %s109, %s110
    %p121 = scmp.eq.s32.totalorder %s16, 0
    %p122 = por %p120, %p121
    %p123 = scmp.ne.s32.totalorder %s109, %s110
    %p124 = scmp.eq.s32.totalorder %s17, 1
    %p125 = por %p123, %p124
    %p127 = scmp.ne.s32.totalorder %s110, %s126
    %p128 = scmp.eq.s32.totalorder %s17, 0
    %p129 = por %p127, %p128
    %s130 = ssub.s32 %s18, %s30
    %p131 = scmp.eq.s32.totalorder %s130, 0
    %s133 = sadd.s32 %s132, 1
    %s134 = scalar_select %p131, %s132, %s133
    %p137 = pneg %p131
    %p138 = scmp.eq.s32.totalorder %s11, 1
    %p139 = por %p137, %p138
    %p140 = scmp.ne.s32.totalorder %s132, %s135
    %p141 = scmp.eq.s32.totalorder %s11, 0
    %p142 = por %p140, %p141
    %p143 = scmp.ne.s32.totalorder %s132, %s135
    %p144 = scmp.eq.s32.totalorder %s16, 1
    %p145 = por %p143, %p144
    %p146 = scmp.ne.s32.totalorder %s135, %s136
    %p147 = scmp.eq.s32.totalorder %s16, 0
    %p148 = por %p146, %p147
    %p149 = scmp.ne.s32.totalorder %s135, %s136
    %p150 = scmp.eq.s32.totalorder %s17, 1
    %p151 = por %p149, %p150
    %p153 = scmp.ne.s32.totalorder %s136, %s152
    %p154 = scmp.eq.s32.totalorder %s17, 0
    %p155 = por %p153, %p154
    %s157 = sadd.s32 %s156, 1
    %p160 = scmp.eq.s32.totalorder %s11, 1
    %p161 = scmp.ne.s32.totalorder %s156, %s158
    %p162 = scmp.eq.s32.totalorder %s11, 0
    %p163 = por %p161, %p162
    %p164 = scmp.ne.s32.totalorder %s156, %s158
    %p165 = scmp.eq.s32.totalorder %s16, 1
    %p166 = por %p164, %p165
    %p167 = scmp.ne.s32.totalorder %s158, %s159
    %p168 = scmp.eq.s32.totalorder %s16, 0
    %p169 = por %p167, %p168
    %p170 = scmp.ne.s32.totalorder %s158, %s159
    %p171 = scmp.eq.s32.totalorder %s17, 1
    %p172 = por %p170, %p171
    %p174 = scmp.ne.s32.totalorder %s159, %s173
    %p175 = scmp.eq.s32.totalorder %s17, 0
    %p176 = por %p174, %p175
    %p177 = scmp.le.s32.totalorder 1, %s11
    %p178 = scmp.lt.s32.totalorder %s11, 3
    %p179 = pnand %p177, %p178
    %p180 = pneg %p179
    // Predicated region
    $region9: #{gat_forward.1} parent=5 // pred_check
      _
    $region10: #{gat_forward.1} parent=5 // pred_check_branch
      %182 = sbr.rel (%p179) target = $region12
    $region11: #{gat_forward.1} parent=5 // pred_region
      %s183 = ssub.s32 %s11, 1
      // Predicated region
      $region13: #{gat_forward.1} parent=11 // pred_check
        %p184 = pneg %p44
      $region14: #{gat_forward.1} parent=11 // pred_check_branch
        %186 = sbr.rel (%p184) target = $region16
      $region15: #{gat_forward.1} parent=11 // pred_region
        _
      $region16: #{gat_forward.1} parent=11 // pred_fallthru
        _
      // Predicated region
      $region17: #{gat_forward.1} parent=11 // pred_check
        %p187 = pneg %p70
      $region18: #{gat_forward.1} parent=11 // pred_check_branch
        %189 = sbr.rel (%p187) target = $region20
      $region19: #{gat_forward.1} parent=11 // pred_region
        %s190 = smul.u32 16, %s21
        %p191 = scmp.lt.s32.totalorder %s190, 15
        %s192 = scalar_select %p191, %s190, 15
        %s193 = smul.addr %s192, 2
        %s194 = scalar_lea.vmem %s1, %s193
        %s195 = smul.u32 16, %s21
      $region20: #{gat_forward.1} parent=11 // pred_fallthru
        _
      // Predicated region
      $region21: #{gat_forward.1} parent=11 // pred_check
        %p196 = pneg %p96
      $region22: #{gat_forward.1} parent=11 // pred_check_branch
        %198 = sbr.rel (%p196) target = $region24
      $region23: #{gat_forward.1} parent=11 // pred_region
        %p199 = scmp.lt.s32.totalorder %s21, 0
        %s200 = scalar_select %p199, %s21, 0
        %s201 = smul.addr %s200, 4
        %s202 = scalar_lea.vmem %s2, %s201
      $region24: #{gat_forward.1} parent=11 // pred_fallthru
        _
    $region12: #{gat_forward.1} parent=5 // pred_fallthru
      _
    %p203 = scmp.lt.s32.totalorder %s11, 2
    // Predicated region
    $region25: #{gat_forward.1} parent=5 // pred_check
      %p204 = pneg %p203
    $region26: #{gat_forward.1} parent=5 // pred_check_branch
      %206 = sbr.rel (%p204) target = $region28
    $region27: #{gat_forward.1} parent=5 // pred_region
      // Predicated region
      $region29: #{gat_forward.1} parent=27 // pred_check
        %p207 = pneg %p116
      $region30: #{gat_forward.1} parent=27 // pred_check_branch
        %209 = sbr.rel (%p207) target = $region32
      $region31: #{gat_forward.1} parent=27 // pred_region
        %p210 = scmp.lt.s32.totalorder %s18, 1
        %s211 = scalar_select %p210, %s18, 1
        %s212 = smul.addr %s211, 16
        %s213 = smul.addr %s212, 4
        %s214 = scalar_lea.vmem %s3, %s213
      $region32: #{gat_forward.1} parent=27 // pred_fallthru
        _
      // Predicated region
      $region33: #{gat_forward.1} parent=27 // pred_check
        %p215 = pneg %p142
      $region34: #{gat_forward.1} parent=27 // pred_check_branch
        %217 = sbr.rel (%p215) target = $region36
      $region35: #{gat_forward.1} parent=27 // pred_region
        %p218 = scmp.lt.s32.totalorder %s18, 1
        %s219 = scalar_select %p218, %s18, 1
        %s220 = scalar_lea.vmem %s4, %s219
      $region36: #{gat_forward.1} parent=27 // pred_fallthru
        _
    $region28: #{gat_forward.1} parent=5 // pred_fallthru
      _
    %p221 = scmp.le.s32.totalorder 1, %s11
    %p222 = scmp.lt.s32.totalorder %s11, 3
    %p223 = pnand %p221, %p222
    %p224 = pneg %p223
    // Predicated region
    $region37: #{gat_forward.1} parent=5 // pred_check
      _
    $region38: #{gat_forward.1} parent=5 // pred_check_branch
      %226 = sbr.rel (%p223) target = $region40
    $region39: #{gat_forward.1} parent=5 // pred_region
      %s227 = ssub.s32 %s11, 1
      %p228 = pneg %p44
      %p229 = pneg %p41
      %s230 = smul.u32 16, %s21
      %p231 = scmp.lt.s32.totalorder %s230, 15
      %s232 = scalar_select %p231, %s230, 15
      %s233 = smul.addr %s232, 2
      %s234 = scalar_lea.vmem %s1, %s233
      %p235 = pneg %p70
      %p236 = pneg %p67
      %p237 = scmp.lt.s32.totalorder %s21, 0
      %s238 = scalar_select %p237, %s21, 0
      %s239 = smul.addr %s238, 4
      %s240 = scalar_lea.vmem %s2, %s239
      %p241 = pneg %p96
      %p242 = pneg %p93
      %p243 = scmp.lt.s32.totalorder %s20, 1
      %s244 = scalar_select %p243, %s20, 1
      %s245 = smul.addr %s244, 16
      %s246 = smul.addr %s245, 4
      %s247 = scalar_lea.vmem %s3, %s246
      %p248 = pneg %p122
      %p249 = pneg %p119
      %p250 = scmp.lt.s32.totalorder %s20, 1
      %s251 = scalar_select %p250, %s20, 1
      %s252 = scalar_lea.vmem %s4, %s251
      %p253 = pneg %p148
      %p254 = pneg %p145
      %p255 = pneg %p169
      %p256 = pneg %p166
      %s257 = smul.u32 16, %s21
      %p258 = scmp.lt.s32.totalorder %s257, 15
      %s259 = scalar_select %p258, %s257, 15
      %s260 = smul.addr %s259, 2
      %s261 = scalar_lea.vmem %s1, %s260
      %s262 = smul.u32 16, %s21
      %p263 = scmp.lt.s32.totalorder %s21, 0
      %s264 = scalar_select %p263, %s21, 0
      %s265 = smul.addr %s264, 4
      %s266 = scalar_lea.vmem %s2, %s265
      %p267 = scmp.lt.s32.totalorder %s20, 1
      %s268 = scalar_select %p267, %s20, 1
      %s269 = smul.addr %s268, 16
      %s270 = smul.addr %s269, 4
      %s271 = scalar_lea.vmem %s3, %s270
      %p272 = scmp.lt.s32.totalorder %s20, 1
      %s273 = scalar_select %p272, %s20, 1
      %s274 = scalar_lea.vmem %s4, %s273
      %p276 = scmp.eq.s32.totalorder %s20, 0
      %p277 = scmp.eq.s32.totalorder %s21, 0
      %p278 = pnand %p276, %p277
      %p279 = pneg %p278
      // Predicated region
      $region41: #{gat_forward.1} parent=39 // pred_check
        _
      $region42: #{gat_forward.1} parent=39 // pred_check_branch
        %281 = sbr.rel (%p278) target = $region44
      $region43: #{gat_forward.1} parent=39 // pred_region
        %v282 = vld [vmem:[%s0] sm:$0xff]
        %v283 = vld [vmem:[%s0 + $0x8] sm:$0xff]
        %v284 = vld [vmem:[%s0 + $0x10] sm:$0xff]
        %v285 = vld [vmem:[%s0 + $0x18] sm:$0xff]
        %v286 = vld [vmem:[%s0 + $0x20] sm:$0xff]
        %v287 = vld [vmem:[%s0 + $0x28] sm:$0xff]
        %v288 = vld [vmem:[%s0 + $0x30] sm:$0xff]
        %v289 = vld [vmem:[%s0 + $0x38] sm:$0xff]
        %v290 = vld [vmem:[%s0 + $0x40] sm:$0xff]
        %v291 = vld [vmem:[%s0 + $0x48] sm:$0xff]
        %v292 = vld [vmem:[%s0 + $0x50] sm:$0xff]
        %v293 = vld [vmem:[%s0 + $0x58] sm:$0xff]
        %v294 = vld [vmem:[%s0 + $0x60] sm:$0xff]
        %v295 = vld [vmem:[%s0 + $0x68] sm:$0xff]
        %v296 = vld [vmem:[%s0 + $0x70] sm:$0xff]
        %v297 = vld [vmem:[%s0 + $0x78] sm:$0xff]
        %298 = vst [vmem:[#allocation2] sm:$0xff] %v282
        %299 = vst [vmem:[#allocation2 + $0x8] sm:$0xff] %v283
        %300 = vst [vmem:[#allocation2 + $0x10] sm:$0xff] %v284
        %301 = vst [vmem:[#allocation2 + $0x18] sm:$0xff] %v285
        %302 = vst [vmem:[#allocation2 + $0x20] sm:$0xff] %v286
        %303 = vst [vmem:[#allocation2 + $0x28] sm:$0xff] %v287
        %304 = vst [vmem:[#allocation2 + $0x30] sm:$0xff] %v288
        %305 = vst [vmem:[#allocation2 + $0x38] sm:$0xff] %v289
        %306 = vst [vmem:[#allocation2 + $0x40] sm:$0xff] %v290
        %307 = vst [vmem:[#allocation2 + $0x48] sm:$0xff] %v291
        %308 = vst [vmem:[#allocation2 + $0x50] sm:$0xff] %v292
        %309 = vst [vmem:[#allocation2 + $0x58] sm:$0xff] %v293
        %310 = vst [vmem:[#allocation2 + $0x60] sm:$0xff] %v294
        %311 = vst [vmem:[#allocation2 + $0x68] sm:$0xff] %v295
        %312 = vst [vmem:[#allocation2 + $0x70] sm:$0xff] %v296
        %313 = vst [vmem:[#allocation2 + $0x78] sm:$0xff] %v297
      $region44: #{gat_forward.1} parent=39 // pred_fallthru
        _
      // Predicated region
      $region45: #{gat_forward.1} parent=39 // pred_check
        %p314 = pneg %p277
      $region46: #{gat_forward.1} parent=39 // pred_check_branch
        %316 = sbr.rel (%p314) target = $region48
      $region47: #{gat_forward.1} parent=39 // pred_region
        %v317 = vld [vmem:[#allocation2] sm:$0xff]
        %v318 = vld [vmem:[#allocation2 + $0x8] sm:$0xff]
        %v319 = vld [vmem:[#allocation2 + $0x10] sm:$0xff]
        %v320 = vld [vmem:[#allocation2 + $0x18] sm:$0xff]
        %v321 = vld [vmem:[#allocation2 + $0x20] sm:$0xff]
        %v322 = vld [vmem:[#allocation2 + $0x28] sm:$0xff]
        %v323 = vld [vmem:[#allocation2 + $0x30] sm:$0xff]
        %v324 = vld [vmem:[#allocation2 + $0x38] sm:$0xff]
        %v325 = vld [vmem:[#allocation2 + $0x40] sm:$0xff]
        %v326 = vld [vmem:[#allocation2 + $0x48] sm:$0xff]
        %v327 = vld [vmem:[#allocation2 + $0x50] sm:$0xff]
        %v328 = vld [vmem:[#allocation2 + $0x58] sm:$0xff]
        %v329 = vld [vmem:[#allocation2 + $0x60] sm:$0xff]
        %v330 = vld [vmem:[#allocation2 + $0x68] sm:$0xff]
        %v331 = vld [vmem:[#allocation2 + $0x70] sm:$0xff]
        %v332 = vld [vmem:[#allocation2 + $0x78] sm:$0xff]
        %v333 = vpack.c.bf16 %v318, %v317
        %v334 = vpack.c.bf16 %v320, %v319
        %v335 = vpack.c.bf16 %v322, %v321
        %v336 = vpack.c.bf16 %v324, %v323
        %v337 = vpack.c.bf16 %v326, %v325
        %v338 = vpack.c.bf16 %v328, %v327
        %v339 = vpack.c.bf16 %v330, %v329
        %v340 = vpack.c.bf16 %v332, %v331
        %v341 = vld [vmem:[%s271] sm:$0xf]
        %v342 = vld [vmem:[%s271 + $0x4] sm:$0xf]
        %v343 = vld [vmem:[%s271 + $0x8] sm:$0xf]
        %v344 = vld [vmem:[%s271 + $0xc] sm:$0xf]
        %v345 = vld [vmem:[%s271 + $0x10] sm:$0xf]
        %v346 = vld [vmem:[%s271 + $0x14] sm:$0xf]
        %v347 = vld [vmem:[%s271 + $0x18] sm:$0xf]
        %v348 = vld [vmem:[%s271 + $0x1c] sm:$0xf]
        %v349 = vld [vmem:[%s271 + $0x20] sm:$0xf]
        %v350 = vld [vmem:[%s271 + $0x24] sm:$0xf]
        %v351 = vld [vmem:[%s271 + $0x28] sm:$0xf]
        %v352 = vld [vmem:[%s271 + $0x2c] sm:$0xf]
        %v353 = vld [vmem:[%s271 + $0x30] sm:$0xf]
        %v354 = vld [vmem:[%s271 + $0x34] sm:$0xf]
        %v355 = vld [vmem:[%s271 + $0x38] sm:$0xf]
        %v356 = vld [vmem:[%s271 + $0x3c] sm:$0xf]
        %v373 = vunpack.c.l.b16 %v341
        %v374 = vunpack.c.l.b16 %v342
        %v375 = vunpack.c.l.b16 %v343
        %v376 = vunpack.c.l.b16 %v344
        %v377 = vunpack.c.l.b16 %v345
        %v378 = vunpack.c.l.b16 %v346
        %v379 = vunpack.c.l.b16 %v347
        %v380 = vunpack.c.l.b16 %v348
        %v381 = vunpack.c.l.b16 %v349
        %v382 = vunpack.c.l.b16 %v350
        %v383 = vunpack.c.l.b16 %v351
        %v384 = vunpack.c.l.b16 %v352
        %v385 = vunpack.c.l.b16 %v353
        %v386 = vunpack.c.l.b16 %v354
        %v387 = vunpack.c.l.b16 %v355
        %v388 = vunpack.c.l.b16 %v356
        %v389 = vpack.c.b16 %v374, %v373
        %v390 = vpack.c.b16 %v376, %v375
        %v391 = vpack.c.b16 %v378, %v377
        %v392 = vpack.c.b16 %v380, %v379
        %v393 = vpack.c.b16 %v382, %v381
        %v394 = vpack.c.b16 %v384, %v383
        %v395 = vpack.c.b16 %v386, %v385
        %v396 = vpack.c.b16 %v388, %v387
        %405 = vmatprep.subr.bf16.mxu0 0
        %406 = vmatpush1.bf16.msra.mxu0 %v396
        %407 = vmatprep.subr.bf16.mxu0 0
        %408 = vmatpush1.bf16.msra.mxu0 %v395
        %409 = vmatprep.subr.bf16.mxu0 0
        %410 = vmatpush1.bf16.msra.mxu0 %v394
        %411 = vmatprep.subr.bf16.mxu0 0
        %412 = vmatpush1.bf16.msra.mxu0 %v393
        %413 = vmatprep.subr.bf16.mxu0 0
        %414 = vmatpush1.bf16.msra.mxu0 %v392
        %415 = vmatprep.subr.bf16.mxu0 0
        %416 = vmatpush1.bf16.msra.mxu0 %v391
        %417 = vmatprep.subr.bf16.mxu0 0
        %418 = vmatpush1.bf16.msra.mxu0 %v390
        %419 = vmatprep.subr.bf16.mxu0 0
        %420 = vmatpush1.bf16.msra.mxu0 %v389
        %421 = vmatprep.subr.bf16.mxu0 0
        %422 = vmatpush2.bf16.msra.mxu0 0
        %423 = vmatprep.subr.bf16.mxu0 0
        %424 = vmatpush2.bf16.msra.mxu0 0
        %425 = vmatprep.subr.bf16.mxu0 0
        %426 = vmatpush2.bf16.msra.mxu0 0
        %427 = vmatprep.subr.bf16.mxu0 0
        %428 = vmatpush2.bf16.msra.mxu0 0
        %429 = vmatprep.subr.bf16.mxu0 0
        %430 = vmatpush2.bf16.msra.mxu0 0
        %431 = vmatprep.subr.bf16.mxu0 0
        %432 = vmatpush2.bf16.msra.mxu0 0
        %433 = vmatprep.subr.bf16.mxu0 0
        %434 = vmatpush2.bf16.msra.mxu0 0
        %435 = vmatprep.subr.bf16.mxu0 0
        %436 = vmatpush2.bf16.msra.mxu0 0
        %437 = vmatprep.mubr.bf16.mxu0 0
        %438 = vmatmul.mubr.bf16.gmra.mxu0 %v333
        %v439 = vpop.f32.mrf.mxu0
        %v440 = vadd.f32 0.0, %v439
        %v441 = vpop.f32.mrf.mxu0
        %v442 = vpop.f32.mrf.mxu0
        %v443 = vadd.f32 0.0, %v442
        %v444 = vpop.f32.mrf.mxu0
        %445 = vmatprep.mubr.bf16.mxu0 0
        %446 = vmatmul.mubr.bf16.gmra.mxu0 %v334
        %v447 = vpop.f32.mrf.mxu0
        %v448 = vadd.f32 0.0, %v447
        %v449 = vpop.f32.mrf.mxu0
        %v450 = vpop.f32.mrf.mxu0
        %v451 = vadd.f32 0.0, %v450
        %v452 = vpop.f32.mrf.mxu0
        %453 = vmatprep.mubr.bf16.mxu0 0
        %454 = vmatmul.mubr.bf16.gmra.mxu0 %v335
        %v455 = vpop.f32.mrf.mxu0
        %v456 = vadd.f32 0.0, %v455
        %v457 = vpop.f32.mrf.mxu0
        %v458 = vpop.f32.mrf.mxu0
        %v459 = vadd.f32 0.0, %v458
        %v460 = vpop.f32.mrf.mxu0
        %461 = vmatprep.mubr.bf16.mxu0 0
        %462 = vmatmul.mubr.bf16.gmra.mxu0 %v336
        %v463 = vpop.f32.mrf.mxu0
        %v464 = vadd.f32 0.0, %v463
        %v465 = vpop.f32.mrf.mxu0
        %v466 = vpop.f32.mrf.mxu0
        %v467 = vadd.f32 0.0, %v466
        %v468 = vpop.f32.mrf.mxu0
        %469 = vmatprep.mubr.bf16.mxu0 0
        %470 = vmatmul.mubr.bf16.gmra.mxu0 %v337
        %v471 = vpop.f32.mrf.mxu0
        %v472 = vadd.f32 0.0, %v471
        %v473 = vpop.f32.mrf.mxu0
        %v474 = vpop.f32.mrf.mxu0
        %v475 = vadd.f32 0.0, %v474
        %v476 = vpop.f32.mrf.mxu0
        %477 = vmatprep.mubr.bf16.mxu0 0
        %478 = vmatmul.mubr.bf16.gmra.mxu0 %v338
        %v479 = vpop.f32.mrf.mxu0
        %v480 = vadd.f32 0.0, %v479
        %v481 = vpop.f32.mrf.mxu0
        %v482 = vpop.f32.mrf.mxu0
        %v483 = vadd.f32 0.0, %v482
        %v484 = vpop.f32.mrf.mxu0
        %485 = vmatprep.mubr.bf16.mxu0 0
        %486 = vmatmul.mubr.bf16.gmra.mxu0 %v339
        %v487 = vpop.f32.mrf.mxu0
        %v488 = vadd.f32 0.0, %v487
        %v489 = vpop.f32.mrf.mxu0
        %v490 = vpop.f32.mrf.mxu0
        %v491 = vadd.f32 0.0, %v490
        %v492 = vpop.f32.mrf.mxu0
        %493 = vmatprep.mubr.bf16.mxu0 0
        %494 = vmatmul.mubr.bf16.gmra.mxu0 %v340
        %v495 = vpop.f32.mrf.mxu0
        %v496 = vadd.f32 0.0, %v495
        %v497 = vpop.f32.mrf.mxu0
        %v498 = vpop.f32.mrf.mxu0
        %v499 = vadd.f32 0.0, %v498
        %v500 = vpop.f32.mrf.mxu0
        %501 = vdwg.mxu0
        %v502 = vpack.c.bf16 %v443, %v440
        %v503 = vpack.c.bf16 %v451, %v448
        %v504 = vpack.c.bf16 %v459, %v456
        %v505 = vpack.c.bf16 %v467, %v464
        %v506 = vpack.c.bf16 %v475, %v472
        %v507 = vpack.c.bf16 %v483, %v480
        %v508 = vpack.c.bf16 %v491, %v488
        %v509 = vpack.c.bf16 %v499, %v496
        %v518 = vunpack.c.l.b16 %v502
        %v519 = vunpack.c.h.b16 %v502
        %v520 = vunpack.c.l.b16 %v503
        %v521 = vunpack.c.h.b16 %v503
        %v522 = vunpack.c.l.b16 %v504
        %v523 = vunpack.c.h.b16 %v504
        %v524 = vunpack.c.l.b16 %v505
        %v525 = vunpack.c.h.b16 %v505
        %v526 = vunpack.c.l.b16 %v506
        %v527 = vunpack.c.h.b16 %v506
        %v528 = vunpack.c.l.b16 %v507
        %v529 = vunpack.c.h.b16 %v507
        %v530 = vunpack.c.l.b16 %v508
        %v531 = vunpack.c.h.b16 %v508
        %v532 = vunpack.c.l.b16 %v509
        %v533 = vunpack.c.h.b16 %v509
        %v534 = vpack.c.b16 %v518, %v518
        %v535 = vpack.c.b16 %v519, %v519
        %v536 = vpack.c.b16 %v520, %v520
        %v537 = vpack.c.b16 %v521, %v521
        %v538 = vpack.c.b16 %v522, %v522
        %v539 = vpack.c.b16 %v523, %v523
        %v540 = vpack.c.b16 %v524, %v524
        %v541 = vpack.c.b16 %v525, %v525
        %v542 = vpack.c.b16 %v526, %v526
        %v543 = vpack.c.b16 %v527, %v527
        %v544 = vpack.c.b16 %v528, %v528
        %v545 = vpack.c.b16 %v529, %v529
        %v546 = vpack.c.b16 %v530, %v530
        %v547 = vpack.c.b16 %v531, %v531
        %v548 = vpack.c.b16 %v532, %v532
        %v549 = vpack.c.b16 %v533, %v533
        %566 = vst [vmem:[#allocation3] sm:$0xf] %v534
        %567 = vst [vmem:[#allocation3 + $0x4] sm:$0xf] %v535
        %568 = vst [vmem:[#allocation3 + $0x8] sm:$0xf] %v536
        %569 = vst [vmem:[#allocation3 + $0xc] sm:$0xf] %v537
        %570 = vst [vmem:[#allocation3 + $0x10] sm:$0xf] %v538
        %571 = vst [vmem:[#allocation3 + $0x14] sm:$0xf] %v539
        %572 = vst [vmem:[#allocation3 + $0x18] sm:$0xf] %v540
        %573 = vst [vmem:[#allocation3 + $0x1c] sm:$0xf] %v541
        %574 = vst [vmem:[#allocation3 + $0x20] sm:$0xf] %v542
        %575 = vst [vmem:[#allocation3 + $0x24] sm:$0xf] %v543
        %576 = vst [vmem:[#allocation3 + $0x28] sm:$0xf] %v544
        %577 = vst [vmem:[#allocation3 + $0x2c] sm:$0xf] %v545
        %578 = vst [vmem:[#allocation3 + $0x30] sm:$0xf] %v546
        %579 = vst [vmem:[#allocation3 + $0x34] sm:$0xf] %v547
        %580 = vst [vmem:[#allocation3 + $0x38] sm:$0xf] %v548
        %581 = vst [vmem:[#allocation3 + $0x3c] sm:$0xf] %v549
        %598 = vrot.lane.b32.xlu0 %v440, 95
        %v599 = vpop.permute.xlu0 %598
        %600 = vrot.lane.b32.xlu0 %v443, 95
        %v601 = vpop.permute.xlu0 %600
        %602 = vrot.lane.b32.xlu0 %v448, 95
        %v603 = vpop.permute.xlu0 %602
        %604 = vrot.lane.b32.xlu0 %v451, 95
        %v605 = vpop.permute.xlu0 %604
        %606 = vrot.lane.b32.xlu0 %v456, 95
        %v607 = vpop.permute.xlu0 %606
        %608 = vrot.lane.b32.xlu0 %v459, 95
        %v609 = vpop.permute.xlu0 %608
        %610 = vrot.lane.b32.xlu0 %v464, 95
        %v611 = vpop.permute.xlu0 %610
        %612 = vrot.lane.b32.xlu0 %v467, 95
        %v613 = vpop.permute.xlu0 %612
        %614 = vrot.lane.b32.xlu0 %v472, 95
        %v615 = vpop.permute.xlu0 %614
        %616 = vrot.lane.b32.xlu0 %v475, 95
        %v617 = vpop.permute.xlu0 %616
        %618 = vrot.lane.b32.xlu0 %v480, 95
        %v619 = vpop.permute.xlu0 %618
        %620 = vrot.lane.b32.xlu0 %v483, 95
        %v621 = vpop.permute.xlu0 %620
        %622 = vrot.lane.b32.xlu0 %v488, 95
        %v623 = vpop.permute.xlu0 %622
        %624 = vrot.lane.b32.xlu0 %v491, 95
        %v625 = vpop.permute.xlu0 %624
        %626 = vrot.lane.b32.xlu0 %v496, 95
        %v627 = vpop.permute.xlu0 %626
        %628 = vrot.lane.b32.xlu0 %v499, 95
        %v629 = vpop.permute.xlu0 %628
        %vm646 = vcmask 7168
        %647 = vst.msk [vmem:[#allocation5] sm:$0xff] %vm646, %v599
        %648 = vst.msk [vmem:[#allocation5 + $0x8] sm:$0xff] %vm646, %v601
        %649 = vst.msk [vmem:[#allocation5 + $0x10] sm:$0xff] %vm646, %v603
        %650 = vst.msk [vmem:[#allocation5 + $0x18] sm:$0xff] %vm646, %v605
        %651 = vst.msk [vmem:[#allocation5 + $0x20] sm:$0xff] %vm646, %v607
        %652 = vst.msk [vmem:[#allocation5 + $0x28] sm:$0xff] %vm646, %v609
        %653 = vst.msk [vmem:[#allocation5 + $0x30] sm:$0xff] %vm646, %v611
        %654 = vst.msk [vmem:[#allocation5 + $0x38] sm:$0xff] %vm646, %v613
        %655 = vst.msk [vmem:[#allocation5 + $0x40] sm:$0xff] %vm646, %v615
        %656 = vst.msk [vmem:[#allocation5 + $0x48] sm:$0xff] %vm646, %v617
        %657 = vst.msk [vmem:[#allocation5 + $0x50] sm:$0xff] %vm646, %v619
        %658 = vst.msk [vmem:[#allocation5 + $0x58] sm:$0xff] %vm646, %v621
        %659 = vst.msk [vmem:[#allocation5 + $0x60] sm:$0xff] %vm646, %v623
        %660 = vst.msk [vmem:[#allocation5 + $0x68] sm:$0xff] %vm646, %v625
        %661 = vst.msk [vmem:[#allocation5 + $0x70] sm:$0xff] %vm646, %v627
        %662 = vst.msk [vmem:[#allocation5 + $0x78] sm:$0xff] %vm646, %v629
        %663 = vxpose.xlu0.b32.start [1/16] %v440, 128
        %664 = vxpose.xlu0.b32.cont [2/16] %v443, 128
        %665 = vxpose.xlu0.b32.cont [3/16] %v448, 128
        %666 = vxpose.xlu0.b32.cont [4/16] %v451, 128
        %667 = vxpose.xlu0.b32.cont [5/16] %v456, 128
        %668 = vxpose.xlu0.b32.cont [6/16] %v459, 128
        %669 = vxpose.xlu0.b32.cont [7/16] %v464, 128
        %670 = vxpose.xlu0.b32.cont [8/16] %v467, 128
        %671 = vxpose.xlu0.b32.cont [9/16] %v472, 128
        %672 = vxpose.xlu0.b32.cont [10/16] %v475, 128
        %673 = vxpose.xlu0.b32.cont [11/16] %v480, 128
        %674 = vxpose.xlu0.b32.cont [12/16] %v483, 128
        %675 = vxpose.xlu0.b32.cont [13/16] %v488, 128
        %676 = vxpose.xlu0.b32.cont [14/16] %v491, 128
        %677 = vxpose.xlu0.b32.cont [15/16] %v496, 128
        %678 = vxpose.xlu0.b32.end [16/16] %v499, 128
        %v679 = vpop.trf.xlu0
        %v680 = vpop.trf.xlu0
        %v681 = vpop.trf.xlu0
        %v682 = vpop.trf.xlu0
        %v683 = vpop.trf.xlu0
        %v684 = vpop.trf.xlu0
        %v685 = vpop.trf.xlu0
        %v686 = vpop.trf.xlu0
        %v687 = vpop.trf.xlu0
        %v688 = vpop.trf.xlu0
        %v689 = vpop.trf.xlu0
        %v690 = vpop.trf.xlu0
        %v691 = vpop.trf.xlu0
        %v692 = vpop.trf.xlu0
        %v693 = vpop.trf.xlu0
        %v694 = vpop.trf.xlu0
        %695 = vst [vmem:[#allocation4] sm:$0x1] %v683
      $region48: #{gat_forward.1} parent=39 // pred_fallthru
        _
      %s696 = smul.u32 %s21, 128
      %v697 = vld [vmem:[%s261] sm:$0x3]
      %v698 = vld [vmem:[%s261 + $0x2] sm:$0x3]
      %v699 = vld [vmem:[%s261 + $0x4] sm:$0x3]
      %v700 = vld [vmem:[%s261 + $0x6] sm:$0x3]
      %v701 = vld [vmem:[%s261 + $0x8] sm:$0x3]
      %v702 = vld [vmem:[%s261 + $0xa] sm:$0x3]
      %v703 = vld [vmem:[%s261 + $0xc] sm:$0x3]
      %v704 = vld [vmem:[%s261 + $0xe] sm:$0x3]
      %v705 = vld [vmem:[%s261 + $0x10] sm:$0x3]
      %v706 = vld [vmem:[%s261 + $0x12] sm:$0x3]
      %v707 = vld [vmem:[%s261 + $0x14] sm:$0x3]
      %v708 = vld [vmem:[%s261 + $0x16] sm:$0x3]
      %v709 = vld [vmem:[%s261 + $0x18] sm:$0x3]
      %v710 = vld [vmem:[%s261 + $0x1a] sm:$0x3]
      %v711 = vld [vmem:[%s261 + $0x1c] sm:$0x3]
      %v712 = vld [vmem:[%s261 + $0x1e] sm:$0x3]
      %v713 = vunpack.c.0.s8 %v697
      %v714 = vunpack.c.0.s8 %v698
      %v715 = vunpack.c.0.s8 %v699
      %v716 = vunpack.c.0.s8 %v700
      %v717 = vunpack.c.0.s8 %v701
      %v718 = vunpack.c.0.s8 %v702
      %v719 = vunpack.c.0.s8 %v703
      %v720 = vunpack.c.0.s8 %v704
      %v721 = vunpack.c.0.s8 %v705
      %v722 = vunpack.c.0.s8 %v706
      %v723 = vunpack.c.0.s8 %v707
      %v724 = vunpack.c.0.s8 %v708
      %v725 = vunpack.c.0.s8 %v709
      %v726 = vunpack.c.0.s8 %v710
      %v727 = vunpack.c.0.s8 %v711
      %v728 = vunpack.c.0.s8 %v712
      %v729 = vcvt.s32.f32 %v713
      %v730 = vcvt.s32.f32 %v714
      %v731 = vcvt.s32.f32 %v715
      %v732 = vcvt.s32.f32 %v716
      %v733 = vcvt.s32.f32 %v717
      %v734 = vcvt.s32.f32 %v718
      %v735 = vcvt.s32.f32 %v719
      %v736 = vcvt.s32.f32 %v720
      %v737 = vcvt.s32.f32 %v721
      %v738 = vcvt.s32.f32 %v722
      %v739 = vcvt.s32.f32 %v723
      %v740 = vcvt.s32.f32 %v724
      %v741 = vcvt.s32.f32 %v725
      %v742 = vcvt.s32.f32 %v726
      %v743 = vcvt.s32.f32 %v727
      %v744 = vcvt.s32.f32 %v728
      %s745 = scalar_lea.vmem [#allocation5], %s696
      %v746 = vld [vmem:[%s745] sm:$0xff]
      %v747 = vld [vmem:[%s745 + $0x8] sm:$0xff]
      %v748 = vld [vmem:[%s745 + $0x10] sm:$0xff]
      %v749 = vld [vmem:[%s745 + $0x18] sm:$0xff]
      %v750 = vld [vmem:[%s745 + $0x20] sm:$0xff]
      %v751 = vld [vmem:[%s745 + $0x28] sm:$0xff]
      %v752 = vld [vmem:[%s745 + $0x30] sm:$0xff]
      %v753 = vld [vmem:[%s745 + $0x38] sm:$0xff]
      %v754 = vld [vmem:[%s745 + $0x40] sm:$0xff]
      %v755 = vld [vmem:[%s745 + $0x48] sm:$0xff]
      %v756 = vld [vmem:[%s745 + $0x50] sm:$0xff]
      %v757 = vld [vmem:[%s745 + $0x58] sm:$0xff]
      %v758 = vld [vmem:[%s745 + $0x60] sm:$0xff]
      %v759 = vld [vmem:[%s745 + $0x68] sm:$0xff]
      %v760 = vld [vmem:[%s745 + $0x70] sm:$0xff]
      %v761 = vld [vmem:[%s745 + $0x78] sm:$0xff]
      %v762 = vld [vmem:[#allocation4] sm:$0x1]
      %764 = vset.pattern.permute.xlu0 0
      %765 = vperm.xlu0 %764, %v746
      %v766 = vpop.permute.xlu0 %765
      %769 = vset.pattern.permute.xlu0 0
      %770 = vperm.xlu0 %769, %v747
      %v771 = vpop.permute.xlu0 %770
      %774 = vset.pattern.permute.xlu0 0
      %775 = vperm.xlu0 %774, %v748
      %v776 = vpop.permute.xlu0 %775
      %779 = vset.pattern.permute.xlu0 0
      %780 = vperm.xlu0 %779, %v749
      %v781 = vpop.permute.xlu0 %780
      %784 = vset.pattern.permute.xlu0 0
      %785 = vperm.xlu0 %784, %v750
      %v786 = vpop.permute.xlu0 %785
      %789 = vset.pattern.permute.xlu0 0
      %790 = vperm.xlu0 %789, %v751
      %v791 = vpop.permute.xlu0 %790
      %794 = vset.pattern.permute.xlu0 0
      %795 = vperm.xlu0 %794, %v752
      %v796 = vpop.permute.xlu0 %795
      %799 = vset.pattern.permute.xlu0 0
      %800 = vperm.xlu0 %799, %v753
      %v801 = vpop.permute.xlu0 %800
      %804 = vset.pattern.permute.xlu0 0
      %805 = vperm.xlu0 %804, %v754
      %v806 = vpop.permute.xlu0 %805
      %809 = vset.pattern.permute.xlu0 0
      %810 = vperm.xlu0 %809, %v755
      %v811 = vpop.permute.xlu0 %810
      %814 = vset.pattern.permute.xlu0 0
      %815 = vperm.xlu0 %814, %v756
      %v816 = vpop.permute.xlu0 %815
      %819 = vset.pattern.permute.xlu0 0
      %820 = vperm.xlu0 %819, %v757
      %v821 = vpop.permute.xlu0 %820
      %824 = vset.pattern.permute.xlu0 0
      %825 = vperm.xlu0 %824, %v758
      %v826 = vpop.permute.xlu0 %825
      %829 = vset.pattern.permute.xlu0 0
      %830 = vperm.xlu0 %829, %v759
      %v831 = vpop.permute.xlu0 %830
      %834 = vset.pattern.permute.xlu0 0
      %835 = vperm.xlu0 %834, %v760
      %v836 = vpop.permute.xlu0 %835
      %839 = vset.pattern.permute.xlu0 0
      %840 = vperm.xlu0 %839, %v761
      %v841 = vpop.permute.xlu0 %840
      %v844 = vlaneseq
      %v845 = vshrl.u32 %v844, 7
      %v846 = vsub.s32 0, %v845
      %v847 = vrot.slane %v762, %v846
      %v849 = vadd.f32 %v766, %v847
      %v850 = vadd.f32 %v771, %v847
      %v851 = vadd.f32 %v776, %v847
      %v852 = vadd.f32 %v781, %v847
      %v853 = vadd.f32 %v786, %v847
      %v854 = vadd.f32 %v791, %v847
      %v855 = vadd.f32 %v796, %v847
      %v856 = vadd.f32 %v801, %v847
      %v857 = vadd.f32 %v806, %v847
      %v858 = vadd.f32 %v811, %v847
      %v859 = vadd.f32 %v816, %v847
      %v860 = vadd.f32 %v821, %v847
      %v861 = vadd.f32 %v826, %v847
      %v862 = vadd.f32 %v831, %v847
      %v863 = vadd.f32 %v836, %v847
      %v864 = vadd.f32 %v841, %v847
      %v865 = vmul.f32 %v849, 0.2
      %v866 = vmul.f32 %v850, 0.2
      %v867 = vmul.f32 %v851, 0.2
      %v868 = vmul.f32 %v852, 0.2
      %v869 = vmul.f32 %v853, 0.2
      %v870 = vmul.f32 %v854, 0.2
      %v871 = vmul.f32 %v855, 0.2
      %v872 = vmul.f32 %v856, 0.2
      %v873 = vmul.f32 %v857, 0.2
      %v874 = vmul.f32 %v858, 0.2
      %v875 = vmul.f32 %v859, 0.2
      %v876 = vmul.f32 %v860, 0.2
      %v877 = vmul.f32 %v861, 0.2
      %v878 = vmul.f32 %v862, 0.2
      %v879 = vmul.f32 %v863, 0.2
      %v880 = vmul.f32 %v864, 0.2
      %v881 = vmax.f32 %v849, %v865
      %v882 = vmax.f32 %v850, %v866
      %v883 = vmax.f32 %v851, %v867
      %v884 = vmax.f32 %v852, %v868
      %v885 = vmax.f32 %v853, %v869
      %v886 = vmax.f32 %v854, %v870
      %v887 = vmax.f32 %v855, %v871
      %v888 = vmax.f32 %v856, %v872
      %v889 = vmax.f32 %v857, %v873
      %v890 = vmax.f32 %v858, %v874
      %v891 = vmax.f32 %v859, %v875
      %v892 = vmax.f32 %v860, %v876
      %v893 = vmax.f32 %v861, %v877
      %v894 = vmax.f32 %v862, %v878
      %v895 = vmax.f32 %v863, %v879
      %v896 = vmax.f32 %v864, %v880
      %vm897 = vcmp.gt.f32.partialorder %v729, 0.0
      %vm898 = vcmp.gt.f32.partialorder %v730, 0.0
      %vm899 = vcmp.gt.f32.partialorder %v731, 0.0
      %vm900 = vcmp.gt.f32.partialorder %v732, 0.0
      %vm901 = vcmp.gt.f32.partialorder %v733, 0.0
      %vm902 = vcmp.gt.f32.partialorder %v734, 0.0
      %vm903 = vcmp.gt.f32.partialorder %v735, 0.0
      %vm904 = vcmp.gt.f32.partialorder %v736, 0.0
      %vm905 = vcmp.gt.f32.partialorder %v737, 0.0
      %vm906 = vcmp.gt.f32.partialorder %v738, 0.0
      %vm907 = vcmp.gt.f32.partialorder %v739, 0.0
      %vm908 = vcmp.gt.f32.partialorder %v740, 0.0
      %vm909 = vcmp.gt.f32.partialorder %v741, 0.0
      %vm910 = vcmp.gt.f32.partialorder %v742, 0.0
      %vm911 = vcmp.gt.f32.partialorder %v743, 0.0
      %vm912 = vcmp.gt.f32.partialorder %v744, 0.0
      %v913 = vsel %vm897, %v881, -1e+30
      %v914 = vsel %vm898, %v882, -1e+30
      %v915 = vsel %vm899, %v883, -1e+30
      %v916 = vsel %vm900, %v884, -1e+30
      %v917 = vsel %vm901, %v885, -1e+30
      %v918 = vsel %vm902, %v886, -1e+30
      %v919 = vsel %vm903, %v887, -1e+30
      %v920 = vsel %vm904, %v888, -1e+30
      %v921 = vsel %vm905, %v889, -1e+30
      %v922 = vsel %vm906, %v890, -1e+30
      %v923 = vsel %vm907, %v891, -1e+30
      %v924 = vsel %vm908, %v892, -1e+30
      %v925 = vsel %vm909, %v893, -1e+30
      %v926 = vsel %vm910, %v894, -1e+30
      %v927 = vsel %vm911, %v895, -1e+30
      %v928 = vsel %vm912, %v896, -1e+30
      %929 = vmax.xlane.f32.xlu0 %v913
      %v930 = vpop.xlane.xlu0 %929
      %931 = vmax.xlane.f32.xlu0 %v914
      %v932 = vpop.xlane.xlu0 %931
      %933 = vmax.xlane.f32.xlu0 %v915
      %v934 = vpop.xlane.xlu0 %933
      %935 = vmax.xlane.f32.xlu0 %v916
      %v936 = vpop.xlane.xlu0 %935
      %937 = vmax.xlane.f32.xlu0 %v917
      %v938 = vpop.xlane.xlu0 %937
      %939 = vmax.xlane.f32.xlu0 %v918
      %v940 = vpop.xlane.xlu0 %939
      %941 = vmax.xlane.f32.xlu0 %v919
      %v942 = vpop.xlane.xlu0 %941
      %943 = vmax.xlane.f32.xlu0 %v920
      %v944 = vpop.xlane.xlu0 %943
      %945 = vmax.xlane.f32.xlu0 %v921
      %v946 = vpop.xlane.xlu0 %945
      %947 = vmax.xlane.f32.xlu0 %v922
      %v948 = vpop.xlane.xlu0 %947
      %949 = vmax.xlane.f32.xlu0 %v923
      %v950 = vpop.xlane.xlu0 %949
      %951 = vmax.xlane.f32.xlu0 %v924
      %v952 = vpop.xlane.xlu0 %951
      %953 = vmax.xlane.f32.xlu0 %v925
      %v954 = vpop.xlane.xlu0 %953
      %955 = vmax.xlane.f32.xlu0 %v926
      %v956 = vpop.xlane.xlu0 %955
      %957 = vmax.xlane.f32.xlu0 %v927
      %v958 = vpop.xlane.xlu0 %957
      %959 = vmax.xlane.f32.xlu0 %v928
      %v960 = vpop.xlane.xlu0 %959
      %v961 = vsub.f32 %v913, %v930
      %v962 = vsub.f32 %v914, %v932
      %v963 = vsub.f32 %v915, %v934
      %v964 = vsub.f32 %v916, %v936
      %v965 = vsub.f32 %v917, %v938
      %v966 = vsub.f32 %v918, %v940
      %v967 = vsub.f32 %v919, %v942
      %v968 = vsub.f32 %v920, %v944
      %v969 = vsub.f32 %v921, %v946
      %v970 = vsub.f32 %v922, %v948
      %v971 = vsub.f32 %v923, %v950
      %v972 = vsub.f32 %v924, %v952
      %v973 = vsub.f32 %v925, %v954
      %v974 = vsub.f32 %v926, %v956
      %v975 = vsub.f32 %v927, %v958
      %v976 = vsub.f32 %v928, %v960
      %v977 = vmul.f32 %v961, 1.442695
      %v978 = vpow.pop %v977
      %v979 = vmul.f32 %v962, 1.442695
      %v980 = vpow.pop %v979
      %v981 = vmul.f32 %v963, 1.442695
      %v982 = vpow.pop %v981
      %v983 = vmul.f32 %v964, 1.442695
      %v984 = vpow.pop %v983
      %v985 = vmul.f32 %v965, 1.442695
      %v986 = vpow.pop %v985
      %v987 = vmul.f32 %v966, 1.442695
      %v988 = vpow.pop %v987
      %v989 = vmul.f32 %v967, 1.442695
      %v990 = vpow.pop %v989
      %v991 = vmul.f32 %v968, 1.442695
      %v992 = vpow.pop %v991
      %v993 = vmul.f32 %v969, 1.442695
      %v994 = vpow.pop %v993
      %v995 = vmul.f32 %v970, 1.442695
      %v996 = vpow.pop %v995
      %v997 = vmul.f32 %v971, 1.442695
      %v998 = vpow.pop %v997
      %v999 = vmul.f32 %v972, 1.442695
      %v1000 = vpow.pop %v999
      %v1001 = vmul.f32 %v973, 1.442695
      %v1002 = vpow.pop %v1001
      %v1003 = vmul.f32 %v974, 1.442695
      %v1004 = vpow.pop %v1003
      %v1005 = vmul.f32 %v975, 1.442695
      %v1006 = vpow.pop %v1005
      %v1007 = vmul.f32 %v976, 1.442695
      %v1008 = vpow.pop %v1007
      %1009 = vadd.xlane.f32.xlu0 %v978
      %v1010 = vpop.xlane.xlu0 %1009
      %1011 = vadd.xlane.f32.xlu0 %v980
      %v1012 = vpop.xlane.xlu0 %1011
      %1013 = vadd.xlane.f32.xlu0 %v982
      %v1014 = vpop.xlane.xlu0 %1013
      %1015 = vadd.xlane.f32.xlu0 %v984
      %v1016 = vpop.xlane.xlu0 %1015
      %1017 = vadd.xlane.f32.xlu0 %v986
      %v1018 = vpop.xlane.xlu0 %1017
      %1019 = vadd.xlane.f32.xlu0 %v988
      %v1020 = vpop.xlane.xlu0 %1019
      %1021 = vadd.xlane.f32.xlu0 %v990
      %v1022 = vpop.xlane.xlu0 %1021
      %1023 = vadd.xlane.f32.xlu0 %v992
      %v1024 = vpop.xlane.xlu0 %1023
      %1025 = vadd.xlane.f32.xlu0 %v994
      %v1026 = vpop.xlane.xlu0 %1025
      %1027 = vadd.xlane.f32.xlu0 %v996
      %v1028 = vpop.xlane.xlu0 %1027
      %1029 = vadd.xlane.f32.xlu0 %v998
      %v1030 = vpop.xlane.xlu0 %1029
      %1031 = vadd.xlane.f32.xlu0 %v1000
      %v1032 = vpop.xlane.xlu0 %1031
      %1033 = vadd.xlane.f32.xlu0 %v1002
      %v1034 = vpop.xlane.xlu0 %1033
      %1035 = vadd.xlane.f32.xlu0 %v1004
      %v1036 = vpop.xlane.xlu0 %1035
      %1037 = vadd.xlane.f32.xlu0 %v1006
      %v1038 = vpop.xlane.xlu0 %1037
      %1039 = vadd.xlane.f32.xlu0 %v1008
      %v1040 = vpop.xlane.xlu0 %1039
      %v1041 = vrcp.pop %v1010
      %v1042 = vrcp.pop %v1012
      %v1043 = vrcp.pop %v1014
      %v1044 = vrcp.pop %v1016
      %v1045 = vrcp.pop %v1018
      %v1046 = vrcp.pop %v1020
      %v1047 = vrcp.pop %v1022
      %v1048 = vrcp.pop %v1024
      %v1049 = vrcp.pop %v1026
      %v1050 = vrcp.pop %v1028
      %v1051 = vrcp.pop %v1030
      %v1052 = vrcp.pop %v1032
      %v1053 = vrcp.pop %v1034
      %v1054 = vrcp.pop %v1036
      %v1055 = vrcp.pop %v1038
      %v1056 = vrcp.pop %v1040
      %v1057 = vmul.f32 %v978, %v1041
      %v1058 = vmul.f32 %v980, %v1042
      %v1059 = vmul.f32 %v982, %v1043
      %v1060 = vmul.f32 %v984, %v1044
      %v1061 = vmul.f32 %v986, %v1045
      %v1062 = vmul.f32 %v988, %v1046
      %v1063 = vmul.f32 %v990, %v1047
      %v1064 = vmul.f32 %v992, %v1048
      %v1065 = vmul.f32 %v994, %v1049
      %v1066 = vmul.f32 %v996, %v1050
      %v1067 = vmul.f32 %v998, %v1051
      %v1068 = vmul.f32 %v1000, %v1052
      %v1069 = vmul.f32 %v1002, %v1053
      %v1070 = vmul.f32 %v1004, %v1054
      %v1071 = vmul.f32 %v1006, %v1055
      %v1072 = vmul.f32 %v1008, %v1056
      %v1073 = vpack.c.bf16 %v1058, %v1057
      %v1074 = vpack.c.bf16 %v1060, %v1059
      %v1075 = vpack.c.bf16 %v1062, %v1061
      %v1076 = vpack.c.bf16 %v1064, %v1063
      %v1077 = vpack.c.bf16 %v1066, %v1065
      %v1078 = vpack.c.bf16 %v1068, %v1067
      %v1079 = vpack.c.bf16 %v1070, %v1069
      %v1080 = vpack.c.bf16 %v1072, %v1071
      %v1081 = vld [vmem:[#allocation3] sm:$0xf]
      %v1082 = vld [vmem:[#allocation3 + $0x4] sm:$0xf]
      %v1083 = vld [vmem:[#allocation3 + $0x8] sm:$0xf]
      %v1084 = vld [vmem:[#allocation3 + $0xc] sm:$0xf]
      %v1085 = vld [vmem:[#allocation3 + $0x10] sm:$0xf]
      %v1086 = vld [vmem:[#allocation3 + $0x14] sm:$0xf]
      %v1087 = vld [vmem:[#allocation3 + $0x18] sm:$0xf]
      %v1088 = vld [vmem:[#allocation3 + $0x1c] sm:$0xf]
      %v1089 = vld [vmem:[#allocation3 + $0x20] sm:$0xf]
      %v1090 = vld [vmem:[#allocation3 + $0x24] sm:$0xf]
      %v1091 = vld [vmem:[#allocation3 + $0x28] sm:$0xf]
      %v1092 = vld [vmem:[#allocation3 + $0x2c] sm:$0xf]
      %v1093 = vld [vmem:[#allocation3 + $0x30] sm:$0xf]
      %v1094 = vld [vmem:[#allocation3 + $0x34] sm:$0xf]
      %v1095 = vld [vmem:[#allocation3 + $0x38] sm:$0xf]
      %v1096 = vld [vmem:[#allocation3 + $0x3c] sm:$0xf]
      %v1097 = vld [vmem:[%s274] sm:$0x1]
      %v1099 = vlaneseq
      %v1100 = vshrl.u32 %v1099, 7
      %v1101 = vsub.s32 0, %v1100
      %v1102 = vrot.slane %v1097, %v1101
      %v1120 = vunpack.c.l.b16 %v1081
      %v1121 = vunpack.c.l.b16 %v1082
      %v1122 = vunpack.c.l.b16 %v1083
      %v1123 = vunpack.c.l.b16 %v1084
      %v1124 = vunpack.c.l.b16 %v1085
      %v1125 = vunpack.c.l.b16 %v1086
      %v1126 = vunpack.c.l.b16 %v1087
      %v1127 = vunpack.c.l.b16 %v1088
      %v1128 = vunpack.c.l.b16 %v1089
      %v1129 = vunpack.c.l.b16 %v1090
      %v1130 = vunpack.c.l.b16 %v1091
      %v1131 = vunpack.c.l.b16 %v1092
      %v1132 = vunpack.c.l.b16 %v1093
      %v1133 = vunpack.c.l.b16 %v1094
      %v1134 = vunpack.c.l.b16 %v1095
      %v1135 = vunpack.c.l.b16 %v1096
      %v1136 = vpack.c.b16 %v1121, %v1120
      %v1137 = vpack.c.b16 %v1123, %v1122
      %v1138 = vpack.c.b16 %v1125, %v1124
      %v1139 = vpack.c.b16 %v1127, %v1126
      %v1140 = vpack.c.b16 %v1129, %v1128
      %v1141 = vpack.c.b16 %v1131, %v1130
      %v1142 = vpack.c.b16 %v1133, %v1132
      %v1143 = vpack.c.b16 %v1135, %v1134
      %1152 = vmatprep.subr.bf16.mxu0 0
      %1153 = vmatpush1.bf16.msra.mxu0 %v1143
      %1154 = vmatprep.subr.bf16.mxu0 0
      %1155 = vmatpush1.bf16.msra.mxu0 %v1142
      %1156 = vmatprep.subr.bf16.mxu0 0
      %1157 = vmatpush1.bf16.msra.mxu0 %v1141
      %1158 = vmatprep.subr.bf16.mxu0 0
      %1159 = vmatpush1.bf16.msra.mxu0 %v1140
      %1160 = vmatprep.subr.bf16.mxu0 0
      %1161 = vmatpush1.bf16.msra.mxu0 %v1139
      %1162 = vmatprep.subr.bf16.mxu0 0
      %1163 = vmatpush1.bf16.msra.mxu0 %v1138
      %1164 = vmatprep.subr.bf16.mxu0 0
      %1165 = vmatpush1.bf16.msra.mxu0 %v1137
      %1166 = vmatprep.subr.bf16.mxu0 0
      %1167 = vmatpush1.bf16.msra.mxu0 %v1136
      %1168 = vmatprep.subr.bf16.mxu0 0
      %1169 = vmatpush2.bf16.msra.mxu0 0
      %1170 = vmatprep.subr.bf16.mxu0 0
      %1171 = vmatpush2.bf16.msra.mxu0 0
      %1172 = vmatprep.subr.bf16.mxu0 0
      %1173 = vmatpush2.bf16.msra.mxu0 0
      %1174 = vmatprep.subr.bf16.mxu0 0
      %1175 = vmatpush2.bf16.msra.mxu0 0
      %1176 = vmatprep.subr.bf16.mxu0 0
      %1177 = vmatpush2.bf16.msra.mxu0 0
      %1178 = vmatprep.subr.bf16.mxu0 0
      %1179 = vmatpush2.bf16.msra.mxu0 0
      %1180 = vmatprep.subr.bf16.mxu0 0
      %1181 = vmatpush2.bf16.msra.mxu0 0
      %1182 = vmatprep.subr.bf16.mxu0 0
      %1183 = vmatpush2.bf16.msra.mxu0 0
      %1184 = vmatprep.mubr.bf16.mxu0 0
      %1185 = vmatmul.mubr.bf16.gmra.mxu0 %v1073
      %v1186 = vpop.f32.mrf.mxu0
      %v1187 = vadd.f32 %v1102, %v1186
      %v1188 = vpop.f32.mrf.mxu0
      %v1189 = vpop.f32.mrf.mxu0
      %v1190 = vadd.f32 %v1102, %v1189
      %v1191 = vpop.f32.mrf.mxu0
      %1192 = vmatprep.mubr.bf16.mxu0 0
      %1193 = vmatmul.mubr.bf16.gmra.mxu0 %v1074
      %v1194 = vpop.f32.mrf.mxu0
      %v1195 = vadd.f32 %v1102, %v1194
      %v1196 = vpop.f32.mrf.mxu0
      %v1197 = vpop.f32.mrf.mxu0
      %v1198 = vadd.f32 %v1102, %v1197
      %v1199 = vpop.f32.mrf.mxu0
      %1200 = vmatprep.mubr.bf16.mxu0 0
      %1201 = vmatmul.mubr.bf16.gmra.mxu0 %v1075
      %v1202 = vpop.f32.mrf.mxu0
      %v1203 = vadd.f32 %v1102, %v1202
      %v1204 = vpop.f32.mrf.mxu0
      %v1205 = vpop.f32.mrf.mxu0
      %v1206 = vadd.f32 %v1102, %v1205
      %v1207 = vpop.f32.mrf.mxu0
      %1208 = vmatprep.mubr.bf16.mxu0 0
      %1209 = vmatmul.mubr.bf16.gmra.mxu0 %v1076
      %v1210 = vpop.f32.mrf.mxu0
      %v1211 = vadd.f32 %v1102, %v1210
      %v1212 = vpop.f32.mrf.mxu0
      %v1213 = vpop.f32.mrf.mxu0
      %v1214 = vadd.f32 %v1102, %v1213
      %v1215 = vpop.f32.mrf.mxu0
      %1216 = vmatprep.mubr.bf16.mxu0 0
      %1217 = vmatmul.mubr.bf16.gmra.mxu0 %v1077
      %v1218 = vpop.f32.mrf.mxu0
      %v1219 = vadd.f32 %v1102, %v1218
      %v1220 = vpop.f32.mrf.mxu0
      %v1221 = vpop.f32.mrf.mxu0
      %v1222 = vadd.f32 %v1102, %v1221
      %v1223 = vpop.f32.mrf.mxu0
      %1224 = vmatprep.mubr.bf16.mxu0 0
      %1225 = vmatmul.mubr.bf16.gmra.mxu0 %v1078
      %v1226 = vpop.f32.mrf.mxu0
      %v1227 = vadd.f32 %v1102, %v1226
      %v1228 = vpop.f32.mrf.mxu0
      %v1229 = vpop.f32.mrf.mxu0
      %v1230 = vadd.f32 %v1102, %v1229
      %v1231 = vpop.f32.mrf.mxu0
      %1232 = vmatprep.mubr.bf16.mxu0 0
      %1233 = vmatmul.mubr.bf16.gmra.mxu0 %v1079
      %v1234 = vpop.f32.mrf.mxu0
      %v1235 = vadd.f32 %v1102, %v1234
      %v1236 = vpop.f32.mrf.mxu0
      %v1237 = vpop.f32.mrf.mxu0
      %v1238 = vadd.f32 %v1102, %v1237
      %v1239 = vpop.f32.mrf.mxu0
      %1240 = vmatprep.mubr.bf16.mxu0 0
      %1241 = vmatmul.mubr.bf16.gmra.mxu0 %v1080
      %v1242 = vpop.f32.mrf.mxu0
      %v1243 = vadd.f32 %v1102, %v1242
      %v1244 = vpop.f32.mrf.mxu0
      %v1245 = vpop.f32.mrf.mxu0
      %v1246 = vadd.f32 %v1102, %v1245
      %v1247 = vpop.f32.mrf.mxu0
      %1248 = vdwg.mxu0
      %vm1249 = vcmp.gt.f32.partialorder %v1187, 0.0
      %vm1250 = vcmp.gt.f32.partialorder %v1190, 0.0
      %vm1251 = vcmp.gt.f32.partialorder %v1195, 0.0
      %vm1252 = vcmp.gt.f32.partialorder %v1198, 0.0
      %vm1253 = vcmp.gt.f32.partialorder %v1203, 0.0
      %vm1254 = vcmp.gt.f32.partialorder %v1206, 0.0
      %vm1255 = vcmp.gt.f32.partialorder %v1211, 0.0
      %vm1256 = vcmp.gt.f32.partialorder %v1214, 0.0
      %vm1257 = vcmp.gt.f32.partialorder %v1219, 0.0
      %vm1258 = vcmp.gt.f32.partialorder %v1222, 0.0
      %vm1259 = vcmp.gt.f32.partialorder %v1227, 0.0
      %vm1260 = vcmp.gt.f32.partialorder %v1230, 0.0
      %vm1261 = vcmp.gt.f32.partialorder %v1235, 0.0
      %vm1262 = vcmp.gt.f32.partialorder %v1238, 0.0
      %vm1263 = vcmp.gt.f32.partialorder %v1243, 0.0
      %vm1264 = vcmp.gt.f32.partialorder %v1246, 0.0
      %v1265 = vmul.f32 %v1187, 1.442695
      %v1266 = vpow.pop %v1265
      %v1267 = vmul.f32 %v1190, 1.442695
      %v1268 = vpow.pop %v1267
      %v1269 = vmul.f32 %v1195, 1.442695
      %v1270 = vpow.pop %v1269
      %v1271 = vmul.f32 %v1198, 1.442695
      %v1272 = vpow.pop %v1271
      %v1273 = vmul.f32 %v1203, 1.442695
      %v1274 = vpow.pop %v1273
      %v1275 = vmul.f32 %v1206, 1.442695
      %v1276 = vpow.pop %v1275
      %v1277 = vmul.f32 %v1211, 1.442695
      %v1278 = vpow.pop %v1277
      %v1279 = vmul.f32 %v1214, 1.442695
      %v1280 = vpow.pop %v1279
      %v1281 = vmul.f32 %v1219, 1.442695
      %v1282 = vpow.pop %v1281
      %v1283 = vmul.f32 %v1222, 1.442695
      %v1284 = vpow.pop %v1283
      %v1285 = vmul.f32 %v1227, 1.442695
      %v1286 = vpow.pop %v1285
      %v1287 = vmul.f32 %v1230, 1.442695
      %v1288 = vpow.pop %v1287
      %v1289 = vmul.f32 %v1235, 1.442695
      %v1290 = vpow.pop %v1289
      %v1291 = vmul.f32 %v1238, 1.442695
      %v1292 = vpow.pop %v1291
      %v1293 = vmul.f32 %v1243, 1.442695
      %v1294 = vpow.pop %v1293
      %v1295 = vmul.f32 %v1246, 1.442695
      %v1296 = vpow.pop %v1295
      %v1297 = vsub.f32 %v1266, 1.0
      %v1298 = vsub.f32 %v1268, 1.0
      %v1299 = vsub.f32 %v1270, 1.0
      %v1300 = vsub.f32 %v1272, 1.0
      %v1301 = vsub.f32 %v1274, 1.0
      %v1302 = vsub.f32 %v1276, 1.0
      %v1303 = vsub.f32 %v1278, 1.0
      %v1304 = vsub.f32 %v1280, 1.0
      %v1305 = vsub.f32 %v1282, 1.0
      %v1306 = vsub.f32 %v1284, 1.0
      %v1307 = vsub.f32 %v1286, 1.0
      %v1308 = vsub.f32 %v1288, 1.0
      %v1309 = vsub.f32 %v1290, 1.0
      %v1310 = vsub.f32 %v1292, 1.0
      %v1311 = vsub.f32 %v1294, 1.0
      %v1312 = vsub.f32 %v1296, 1.0
      %v1313 = vsel %vm1249, %v1187, %v1297
      %v1314 = vsel %vm1250, %v1190, %v1298
      %v1315 = vsel %vm1251, %v1195, %v1299
      %v1316 = vsel %vm1252, %v1198, %v1300
      %v1317 = vsel %vm1253, %v1203, %v1301
      %v1318 = vsel %vm1254, %v1206, %v1302
      %v1319 = vsel %vm1255, %v1211, %v1303
      %v1320 = vsel %vm1256, %v1214, %v1304
      %v1321 = vsel %vm1257, %v1219, %v1305
      %v1322 = vsel %vm1258, %v1222, %v1306
      %v1323 = vsel %vm1259, %v1227, %v1307
      %v1324 = vsel %vm1260, %v1230, %v1308
      %v1325 = vsel %vm1261, %v1235, %v1309
      %v1326 = vsel %vm1262, %v1238, %v1310
      %v1327 = vsel %vm1263, %v1243, %v1311
      %v1328 = vsel %vm1264, %v1246, %v1312
      %s1329 = scalar_lea.vmem [#allocation2], %s696
      %1330 = vst [vmem:[%s1329] sm:$0xff] %v1313
      %1331 = vst [vmem:[%s1329 + $0x8] sm:$0xff] %v1314
      %1332 = vst [vmem:[%s1329 + $0x10] sm:$0xff] %v1315
      %1333 = vst [vmem:[%s1329 + $0x18] sm:$0xff] %v1316
      %1334 = vst [vmem:[%s1329 + $0x20] sm:$0xff] %v1317
      %1335 = vst [vmem:[%s1329 + $0x28] sm:$0xff] %v1318
      %1336 = vst [vmem:[%s1329 + $0x30] sm:$0xff] %v1319
      %1337 = vst [vmem:[%s1329 + $0x38] sm:$0xff] %v1320
      %1338 = vst [vmem:[%s1329 + $0x40] sm:$0xff] %v1321
      %1339 = vst [vmem:[%s1329 + $0x48] sm:$0xff] %v1322
      %1340 = vst [vmem:[%s1329 + $0x50] sm:$0xff] %v1323
      %1341 = vst [vmem:[%s1329 + $0x58] sm:$0xff] %v1324
      %1342 = vst [vmem:[%s1329 + $0x60] sm:$0xff] %v1325
      %1343 = vst [vmem:[%s1329 + $0x68] sm:$0xff] %v1326
      %1344 = vst [vmem:[%s1329 + $0x70] sm:$0xff] %v1327
      %1345 = vst [vmem:[%s1329 + $0x78] sm:$0xff] %v1328
      %p1346 = scmp.eq.s32.totalorder %s20, 1
      %p1347 = pnand %p1346, %p277
      %p1348 = pneg %p1347
      // Predicated region
      $region49: #{gat_forward.1} parent=39 // pred_check
        _
      $region50: #{gat_forward.1} parent=39 // pred_check_branch
        %1350 = sbr.rel (%p1347) target = $region52
      $region51: #{gat_forward.1} parent=39 // pred_region
        %1351 = vst [vmem:[%s5] sm:$0xff] 0.0
        %1352 = vst [vmem:[%s5 + $0x8] sm:$0xff] 0.0
      $region52: #{gat_forward.1} parent=39 // pred_fallthru
        _
      // Predicated region
      $region53: #{gat_forward.1} parent=39 // pred_check
        %p1353 = pneg %p1346
      $region54: #{gat_forward.1} parent=39 // pred_check_branch
        %1355 = sbr.rel (%p1353) target = $region56
      $region55: #{gat_forward.1} parent=39 // pred_region
        %v1356 = vld [vmem:[%s5] sm:$0xff]
        %v1357 = vld [vmem:[%s5 + $0x8] sm:$0xff]
        %v1358 = vld [vmem:[%s266] sm:$0xf]
        %v1359 = vld [vmem:[%s266 + $0x4] sm:$0xf]
        %v1360 = vpack.c.bf16 %v1314, %v1313
        %v1361 = vpack.c.bf16 %v1316, %v1315
        %v1362 = vpack.c.bf16 %v1318, %v1317
        %v1363 = vpack.c.bf16 %v1320, %v1319
        %v1364 = vpack.c.bf16 %v1322, %v1321
        %v1365 = vpack.c.bf16 %v1324, %v1323
        %v1366 = vpack.c.bf16 %v1326, %v1325
        %v1367 = vpack.c.bf16 %v1328, %v1327
        %v1370 = vunpack.c.l.b16 %v1358
        %v1371 = vunpack.c.l.b16 %v1359
        %v1372 = vpack.c.b16 %v1371, %v1370
        %1374 = vmatprep.subr.bf16.mxu0 0
        %1375 = vmatpush1.bf16.msra.mxu0 %v1367
        %1376 = vmatprep.subr.bf16.mxu0 0
        %1377 = vmatpush1.bf16.msra.mxu0 %v1366
        %1378 = vmatprep.subr.bf16.mxu0 0
        %1379 = vmatpush1.bf16.msra.mxu0 %v1365
        %1380 = vmatprep.subr.bf16.mxu0 0
        %1381 = vmatpush1.bf16.msra.mxu0 %v1364
        %1382 = vmatprep.subr.bf16.mxu0 0
        %1383 = vmatpush1.bf16.msra.mxu0 %v1363
        %1384 = vmatprep.subr.bf16.mxu0 0
        %1385 = vmatpush1.bf16.msra.mxu0 %v1362
        %1386 = vmatprep.subr.bf16.mxu0 0
        %1387 = vmatpush1.bf16.msra.mxu0 %v1361
        %1388 = vmatprep.subr.bf16.mxu0 0
        %1389 = vmatpush1.bf16.msra.mxu0 %v1360
        %1390 = vmatprep.subr.bf16.mxu0 0
        %1391 = vmatpush2.bf16.msra.mxu0 0
        %1392 = vmatprep.subr.bf16.mxu0 0
        %1393 = vmatpush2.bf16.msra.mxu0 0
        %1394 = vmatprep.subr.bf16.mxu0 0
        %1395 = vmatpush2.bf16.msra.mxu0 0
        %1396 = vmatprep.subr.bf16.mxu0 0
        %1397 = vmatpush2.bf16.msra.mxu0 0
        %1398 = vmatprep.subr.bf16.mxu0 0
        %1399 = vmatpush2.bf16.msra.mxu0 0
        %1400 = vmatprep.subr.bf16.mxu0 0
        %1401 = vmatpush2.bf16.msra.mxu0 0
        %1402 = vmatprep.subr.bf16.mxu0 0
        %1403 = vmatpush2.bf16.msra.mxu0 0
        %1404 = vmatprep.subr.bf16.mxu0 0
        %1405 = vmatpush2.bf16.msra.mxu0 0
        %1406 = vmatprep.mubr.bf16.mxu0 0
        %1407 = vmatmul.mubr.bf16.gmra.mxu0 %v1372
        %v1408 = vpop.f32.mrf.mxu0
        %v1409 = vadd.f32 0.0, %v1408
        %v1410 = vpop.f32.mrf.mxu0
        %v1411 = vpop.f32.mrf.mxu0
        %v1412 = vadd.f32 0.0, %v1411
        %v1413 = vpop.f32.mrf.mxu0
        %1414 = vdwg.mxu0
        %v1415 = vadd.f32 %v1356, %v1409
        %v1416 = vadd.f32 %v1357, %v1412
        %1417 = vst [vmem:[%s5] sm:$0xff] %v1415
        %1418 = vst [vmem:[%s5 + $0x8] sm:$0xff] %v1416
      $region56: #{gat_forward.1} parent=39 // pred_fallthru
        _
      // Predicated region
      $region57: #{gat_forward.1} parent=39 // pred_check
        %p1419 = pneg %p166
      $region58: #{gat_forward.1} parent=39 // pred_check_branch
        %1421 = sbr.rel (%p1419) target = $region60
      $region59: #{gat_forward.1} parent=39 // pred_region
        _
      $region60: #{gat_forward.1} parent=39 // pred_fallthru
        _
      // Predicated region
      $region61: #{gat_forward.1} parent=39 // pred_check
        %p1422 = pneg %p166
      $region62: #{gat_forward.1} parent=39 // pred_check_branch
        %1424 = sbr.rel (%p1422) target = $region64
      $region63: #{gat_forward.1} parent=39 // pred_region
        _
      $region64: #{gat_forward.1} parent=39 // pred_fallthru
        _
    $region40: #{gat_forward.1} parent=5 // pred_fallthru
      _
    %p1425 = scmp.le.s32.totalorder 2, %s11
    // Predicated region
    $region65: #{gat_forward.1} parent=5 // pred_check
      %p1426 = pneg %p1425
    $region66: #{gat_forward.1} parent=5 // pred_check_branch
      %1428 = sbr.rel (%p1426) target = $region68
    $region67: #{gat_forward.1} parent=5 // pred_region
      %s1429 = ssub.s32 %s11, 2
    $region68: #{gat_forward.1} parent=5 // pred_fallthru
      _
  $region6: #{gat_forward.1} parent=0 // loop_footer
    %s15 = sadd.s32 1, %s11
  $region7: #{gat_forward.1} parent=0 // loop_footer_branch
    %10 = sbr.rel target = $region3
  $region8: #{gat_forward.1} parent=0 // loop_exit
    _

</llo_original>
